<compile_context>
chip_gen: v7x
topology: tpu7x:2x2x1
jax: 0.10.0
libtpu: 0.0.40
codegen_flags: <defaults>
</compile_context>

<pallas_src>
import functools

import jax
import jax.numpy as jnp
from jax.experimental import pallas as pl
from jax.experimental.pallas import tpu as pltpu

EPS = 1e-5
EXPANSION = 4


def _round_up(x, m):
    return (x + m - 1) // m * m


def _detect_big_vmem():
    # v5e / v6e: 128 MiB VMEM per core, v7x: 64 MiB.  Fall back to the
    # conservative (small-VMEM) tuning if the query is unavailable.
    try:
        return int(pltpu.get_tpu_info().vmem_capacity_bytes) >= 96 * 1024 * 1024
    except Exception:  # pragma: no cover - defensive
        return False


_BIG_VMEM = _detect_big_vmem()
TM_DEFAULT = 1024 if _BIG_VMEM else 512           # bigger M tiles are free on 128 MiB parts
VMEM_LIMIT_BYTES = (64 if _BIG_VMEM else 40) * 1024 * 1024
# Whole-image 3x3 blocks above this fall back to im2col (keeps VMEM bounded).
_CONV_SLAB_LIMIT = 12 * 1024 * 1024


def _compiler_params(semantics):
    return pltpu.CompilerParams(dimension_semantics=semantics,
                                vmem_limit_bytes=VMEM_LIMIT_BYTES)


# ----------------------------- Pallas kernels ------------------------------

def _mm_bias_kernel(x_ref, w_ref, b_ref, o_ref, acc_ref, *, relu):
    # y = act(x @ w + b); BN scale already folded into w.  K-tiled reduction.
    @pl.when(pl.program_id(2) == 0)
    def _():
        acc_ref[...] = jnp.zeros_like(acc_ref)

    acc_ref[...] += jnp.dot(x_ref[...], w_ref[...],
                            preferred_element_type=jnp.float32)

    @pl.when(pl.program_id(2) == pl.num_programs(2) - 1)
    def _():
        y = acc_ref[...] + b_ref[...]
        if relu:
            y = jnp.maximum(y, 0.0)
        o_ref[...] = y.astype(o_ref.dtype)


def _mm_bias_res_kernel(x_ref, w_ref, b_ref, r_ref, o_ref, acc_ref):
    # Final 1x1 conv + BN + identity shortcut + ReLU.
    @pl.when(pl.program_id(2) == 0)
    def _():
        acc_ref[...] = jnp.zeros_like(acc_ref)

    acc_ref[...] += jnp.dot(x_ref[...], w_ref[...],
                            preferred_element_type=jnp.float32)

    @pl.when(pl.program_id(2) == pl.num_programs(2) - 1)
    def _():
        y = acc_ref[...] + b_ref[...] + r_ref[...].astype(jnp.float32)
        o_ref[...] = jnp.maximum(y, 0.0).astype(o_ref.dtype)


def _mm_bias_proj_kernel(x_ref, w_ref, b_ref, xs_ref, ws_ref, o_ref, acc_ref):
    # Final 1x1 conv + BN fused with the projection-shortcut 1x1 conv + BN + ReLU.
    @pl.when(pl.program_id(2) == 0)
    def _():
        acc_ref[...] = jnp.zeros_like(acc_ref)

    acc_ref[...] += jnp.dot(x_ref[...], w_ref[...],
                            preferred_element_type=jnp.float32)

    @pl.when(pl.program_id(2) == pl.num_programs(2) - 1)
    def _():
        y = acc_ref[...] + jnp.dot(xs_ref[...], ws_ref[...],
                                   preferred_element_type=jnp.float32)
        o_ref[...] = jnp.maximum(y + b_ref[...], 0.0).astype(o_ref.dtype)


def _conv3x3_s1_kernel(x_ref, w_ref, b_ref, o_ref, *, wp):
    # x_ref : ((h+2)*wp, 3C) kw-folded, spatially padded activation (bf16),
    #         wp is a multiple of 8 so the kh*wp shifts are sublane-aligned.
    # w_ref : (3, 3C, Cout) per-kh weights (kw taps folded into K), BN folded.
    # o_ref : (h, w, Cout) — junk columns are dropped at the store.
    h, w, cout = o_ref.shape
    r = h * wp
    acc = jnp.dot(x_ref[0:r, :], w_ref[0], preferred_element_type=jnp.float32)
    acc = acc + jnp.dot(x_ref[wp:wp + r, :], w_ref[1],
                        preferred_element_type=jnp.float32)
    acc = acc + jnp.dot(x_ref[2 * wp:2 * wp + r, :], w_ref[2],
                        preferred_element_type=jnp.float32)
    y = jnp.maximum(acc + b_ref[...], 0.0)
    o_ref[...] = y.reshape(h, wp, cout)[:, :w, :].astype(o_ref.dtype)


def _conv3x3_s2_kernel(xe_ref, xo_ref, w_ref, b_ref, o_ref, *, wop):
    # Stride-2 variant: even / odd padded-row planes keep all three kh taps as
    # sublane-aligned constant row shifts (no im2col, no strided gathers).
    ho, wo, cout = o_ref.shape
    r = ho * wop
    acc = jnp.dot(xe_ref[0:r, :], w_ref[0], preferred_element_type=jnp.float32)
    acc = acc + jnp.dot(xo_ref[0:r, :], w_ref[1],
                        preferred_element_type=jnp.float32)
    acc = acc + jnp.dot(xe_ref[wop:wop + r, :], w_ref[2],
                        preferred_element_type=jnp.float32)
    y = jnp.maximum(acc + b_ref[...], 0.0)
    o_ref[...] = y.reshape(ho, wop, cout)[:, :wo, :].astype(o_ref.dtype)


# ------------------------------ wrappers ------------------------------------

def _pick_tn(n):
    # Hardened: partial last tiles are fine for N, so never exceed 512.
    return n if n <= 512 else 512


def _pick_tk(k):
    # Only K-tile when a clean (multiple-of-128) divisor exists: partial K
    # tiles would feed garbage into the reduction.
    if k <= 1024:
        return k
    for t in (512, 256, 128):
        if k % t == 0:
            return t
    return k


def fused_matmul(x, w, bias, *, relu=True, residual=None, shortcut=None,
                 out_dtype=jnp.float32, tm=None):
    """act(x @ w + bias [+ residual] [+ xs @ ws]) — bf16 MXU, f32 accumulation.

    Weights arrive with the BN scale folded in, cast to bf16.  K is tiled onto
    an "arbitrary" reduction grid axis with an f32 VMEM accumulator so that
    large-K layers (stage-4 1x1, im2col fallback) never blow the VMEM budget.
    """
    M, K = x.shape
    K2, N = w.shape
    assert K == K2
    tm = min(TM_DEFAULT if tm is None else tm, M)
    tn = _pick_tn(N)
    tk = _pick_tk(K)
    grid = (pl.cdiv(M, tm), pl.cdiv(N, tn), pl.cdiv(K, tk))

    bias2 = bias.reshape(1, N).astype(jnp.float32)

    in_specs = [
        pl.BlockSpec((tm, tk), lambda i, j, k: (i, k)),
        pl.BlockSpec((tk, tn), lambda i, j, k: (k, j)),
        pl.BlockSpec((1, tn), lambda i, j, k: (0, j)),
    ]
    args = [x, w, bias2]

    if shortcut is not None:
        xs, ws = shortcut
        Ks = xs.shape[1]
        assert xs.shape[0] == M and ws.shape == (Ks, N)
        kernel = _mm_bias_proj_kernel
        in_specs += [pl.BlockSpec((tm, Ks), lambda i, j, k: (i, 0)),
                     pl.BlockSpec((Ks, tn), lambda i, j, k: (0, j))]
        args += [xs, ws]
    elif residual is not None:
        assert residual.shape == (M, N)
        kernel = _mm_bias_res_kernel
        in_specs.append(pl.BlockSpec((tm, tn), lambda i, j, k: (i, j)))
        args.append(residual)
    else:
        kernel = functools.partial(_mm_bias_kernel, relu=relu)

    return pl.pallas_call(
        kernel,
        out_shape=jax.ShapeDtypeStruct((M, N), out_dtype),
        grid=grid,
        in_specs=in_specs,
        out_specs=pl.BlockSpec((tm, tn), lambda i, j, k: (i, j)),
        scratch_shapes=[pltpu.VMEM((tm, tn), jnp.float32)],
        compiler_params=_compiler_params(("parallel", "parallel", "arbitrary")),
    )(*args)


def conv3x3_bn_relu(y_nhwc, w_hwio, scale, bias, *, stride=1,
                    out_dtype=jnp.bfloat16):
    """Fused 3x3 conv (pad=1, stride in {1,2}) + BN + ReLU, no im2col.

    The kw taps are folded into the contraction (K = 3*C) by pre-interleaving
    the three width-shifted channel slabs along lanes; the remaining kh taps
    are sublane-aligned constant row shifts in a flat, width-padded frame.
    """
    n, h, w, c = y_nhwc.shape
    cout = w_hwio.shape[3]
    w3 = (w_hwio * scale[None, None, None, :]).reshape(3, 3 * c, cout)
    w3 = w3.astype(jnp.bfloat16)
    b2 = bias.reshape(1, cout).astype(jnp.float32)

    if stride == 1:
        wp = _round_up(w + 2, 8)                  # flat row stride, sublane aligned
        # H -> h+2 (pad 1 / 1); W -> wp+2 so all three kw slabs of width wp exist.
        yp = jnp.pad(y_nhwc, ((0, 0), (1, 1), (1, wp + 1 - w), (0, 0)))
        x3 = jnp.concatenate([yp[:, :, kw:kw + wp, :] for kw in range(3)],
                             axis=-1)
        x3 = x3.reshape(n, (h + 2) * wp, 3 * c).astype(jnp.bfloat16)
        return pl.pallas_call(
            functools.partial(_conv3x3_s1_kernel, wp=wp),
            out_shape=jax.ShapeDtypeStruct((n, h, w, cout), out_dtype),
            grid=(n,),
            in_specs=[
                pl.BlockSpec((None, (h + 2) * wp, 3 * c), lambda i: (i, 0, 0)),
                pl.BlockSpec((3, 3 * c, cout), lambda i: (0, 0, 0)),
                pl.BlockSpec((1, cout), lambda i: (0, 0)),
            ],
            out_specs=pl.BlockSpec((None, h, w, cout), lambda i: (i, 0, 0, 0)),
            compiler_params=_compiler_params(("parallel",)),
        )(x3, w3, b2)

    if stride == 2:
        ho = (h - 1) // 2 + 1
        wo = (w - 1) // 2 + 1
        wop = _round_up(wo, 8)
        right = 2 * wop - w                       # padded width = 2*wop + 1
        yp = jnp.pad(y_nhwc, ((0, 0), (1, 1), (1, right), (0, 0)))
        # x3[b, i, jo] = concat_kw yp[b, i, 2*jo + kw]      -> (n, h+2, wop, 3c)
        x3 = jnp.concatenate(
            [yp[:, :, kw:kw + 2 * wop:2, :] for kw in range(3)], axis=-1)
        xe = x3[:, 0::2].reshape(n, (ho + 1) * wop, 3 * c).astype(jnp.bfloat16)
        xo = x3[:, 1::2][:, :ho].reshape(n, ho * wop, 3 * c).astype(jnp.bfloat16)
        return pl.pallas_call(
            functools.partial(_conv3x3_s2_kernel, wop=wop),
            out_shape=jax.ShapeDtypeStruct((n, ho, wo, cout), out_dtype),
            grid=(n,),
            in_specs=[
                pl.BlockSpec((None, (ho + 1) * wop, 3 * c), lambda i: (i, 0, 0)),
                pl.BlockSpec((None, ho * wop, 3 * c), lambda i: (i, 0, 0)),
                pl.BlockSpec((3, 3 * c, cout), lambda i: (0, 0, 0)),
                pl.BlockSpec((1, cout), lambda i: (0, 0)),
            ],
            out_specs=pl.BlockSpec((None, ho, wo, cout),
                                   lambda i: (i, 0, 0, 0)),
            compiler_params=_compiler_params(("parallel",)),
        )(xe, xo, w3, b2)

    raise ValueError("conv3x3_bn_relu supports stride 1 or 2")


# ------------------------------- JAX glue -----------------------------------

def _bn_fold(gamma, beta, mean, var):
    scale = gamma / jnp.sqrt(var + EPS)
    bias = beta - mean * scale
    return scale, bias


def _im2col3x3(x, stride):
    """x: NHWC -> (N, Ho, Wo, 9*C) patches (kh, kw, c ordering), pad=1."""
    n, h, w, c = x.shape
    xp = jnp.pad(x, ((0, 0), (1, 1), (1, 1), (0, 0)))
    cols = []
    for kh in range(3):
        for kw in range(3):
            cols.append(xp[:, kh:kh + h, kw:kw + w, :][:, ::stride, ::stride, :])
    return jnp.concatenate(cols, axis=-1)


def bottleneck_forward_nhwc(x, params, stride=1, out_dtype=jnp.float32):
    """Forward of the PyTorch BottleNeck module (eval-mode BN), NHWC in/out."""
    n, h, w, cin = x.shape
    cmid = params["w1"].shape[1]
    cout = cmid * EXPANSION

    x_rows = x.reshape(-1, cin).astype(jnp.bfloat16)

    # ---- conv1 1x1 + BN + ReLU (fused matmul, bf16 chain) ----
    s1, b1 = _bn_fold(params["g1"], params["b1"], params["m1"], params["v1"])
    w1 = (params["w1"] * s1[None, :]).astype(jnp.bfloat16)
    y1 = fused_matmul(x_rows, w1, b1, relu=True, out_dtype=jnp.bfloat16)
    y1 = y1.reshape(n, h, w, cmid)

    # ---- conv2 3x3 (stride, pad=1) + BN + ReLU ----
    s2, b2 = _bn_fold(params["g2"], params["b2"], params["m2"], params["v2"])
    slab_bytes = (h + 2) * _round_up(w + 2, 8) * 3 * cmid * 2
    if stride in (1, 2) and slab_bytes <= _CONV_SLAB_LIMIT:
        y2 = conv3x3_bn_relu(y1, params["w2"], s2, b2, stride=stride)
    else:
        # TODO(synk): strides > 2 (and oversized per-image slabs) fall back to
        # wrapper-side im2col + fused matmul.
        patches = _im2col3x3(y1, stride)
        w2f = (params["w2"] * s2[None, None, None, :]).reshape(9 * cmid, cmid)
        y2 = fused_matmul(patches.reshape(-1, 9 * cmid).astype(jnp.bfloat16),
                          w2f.astype(jnp.bfloat16), b2, relu=True,
                          out_dtype=jnp.bfloat16)
        y2 = y2.reshape(n, patches.shape[1], patches.shape[2], cmid)
    ho, wo = y2.shape[1], y2.shape[2]
    y2_rows = y2.reshape(-1, cmid)

    # ---- conv3 1x1 (expansion) + BN, fused with shortcut and final ReLU ----
    s3, b3 = _bn_fold(params["g3"], params["b3"], params["m3"], params["v3"])
    w3 = (params["w3"] * s3[None, :]).astype(jnp.bfloat16)

    if stride != 1 or cin != cout:
        ss, bs = _bn_fold(params["gs"], params["bs"], params["ms"], params["vs"])
        ws = (params["ws"] * ss[None, :]).astype(jnp.bfloat16)
        xs_rows = x[:, ::stride, ::stride, :].reshape(-1, cin).astype(jnp.bfloat16)
        out = fused_matmul(y2_rows, w3, b3 + bs, relu=True,
                           shortcut=(xs_rows, ws), out_dtype=out_dtype)
    else:
        out = fused_matmul(y2_rows, w3, b3, relu=True,
                           residual=x_rows, out_dtype=out_dtype)
    return out.reshape(n, ho, wo, cout)


def bottleneck_forward(x_nchw, params, stride=1, out_dtype=jnp.float32):
    """NCHW wrapper matching the PyTorch module interface.

    When chaining blocks, call bottleneck_forward_nhwc directly with
    out_dtype=bf16 so the NCHW<->NHWC transposes stay out of the per-block
    path and the writeback is half-width.
    """
    x = jnp.transpose(x_nchw, (0, 2, 3, 1))                  # NCHW -> NHWC
    out = bottleneck_forward_nhwc(x, params, stride=stride, out_dtype=out_dtype)
    return jnp.transpose(out, (0, 3, 1, 2))                  # NHWC -> NCHW


# ------------------------- deterministic parameters --------------------------

def init_params(key, in_channels, out_channels):
    cmid = out_channels
    cout = out_channels * EXPANSION
    keys = jax.random.split(key, 20)
    k = iter(keys)

    def bn_params(kk, c):
        k1, k2, k3, k4 = jax.random.split(kk, 4)
        return (jax.random.normal(k1, (c,)) * 0.1 + 1.0,            # gamma
                jax.random.normal(k2, (c,)) * 0.1,                  # beta
                jax.random.normal(k3, (c,)) * 0.1,                  # running_mean
                jnp.abs(jax.random.normal(k4, (c,))) * 0.1 + 0.5)   # running_var

    p = {}
    p["w1"] = jax.random.normal(next(k), (in_channels, cmid)) * 0.1
    p["g1"], p["b1"], p["m1"], p["v1"] = bn_params(next(k), cmid)
    p["w2"] = jax.random.normal(next(k), (3, 3, cmid, cmid)) * 0.1     # HWIO
    p["g2"], p["b2"], p["m2"], p["v2"] = bn_params(next(k), cmid)
    p["w3"] = jax.random.normal(next(k), (cmid, cout)) * 0.1
    p["g3"], p["b3"], p["m3"], p["v3"] = bn_params(next(k), cout)
    p["ws"] = jax.random.normal(next(k), (in_channels, cout)) * 0.1
    p["gs"], p["bs"], p["ms"], p["vs"] = bn_params(next(k), cout)
    return p


# ------------------------------ reference (JAX) ------------------------------

def ref_forward(x_nchw, p, stride=1):
    x = jnp.transpose(x_nchw, (0, 2, 3, 1))
    cin = x.shape[-1]
    cmid = p["w1"].shape[1]
    cout = cmid * EXPANSION

    def conv(x, w_hwio, s, pad):
        return jax.lax.conv_general_dilated(
            x, w_hwio, (s, s), [(pad, pad), (pad, pad)],
            dimension_numbers=("NHWC", "HWIO", "NHWC"))

    def bn(x, g, b, m, v):
        return (x - m) / jnp.sqrt(v + EPS) * g + b

    y = jax.nn.relu(bn(conv(x, p["w1"].reshape(1, 1, cin, cmid), 1, 0),
                       p["g1"], p["b1"], p["m1"], p["v1"]))
    y = jax.nn.relu(bn(conv(y, p["w2"], stride, 1),
                       p["g2"], p["b2"], p["m2"], p["v2"]))
    y = bn(conv(y, p["w3"].reshape(1, 1, cmid, cout), 1, 0),
           p["g3"], p["b3"], p["m3"], p["v3"])
    if stride != 1 or cin != cout:
        sc = bn(conv(x, p["ws"].reshape(1, 1, cin, cout), stride, 0),
                p["gs"], p["bs"], p["ms"], p["vs"])
    else:
        sc = x
    return jnp.transpose(jax.nn.relu(y + sc), (0, 3, 1, 2))


# ----------------------------------- main ------------------------------------

if __name__ == "__main__":
    key = jax.random.PRNGKey(0)

    # bf16 operands with f32 accumulation -> compare against the f32 reference
    # with a bf16-appropriate tolerance.
    TOL = 2e-2

    def run_case(case_key, in_channels, out_channels, stride, spatial=16, batch=2):
        kx, kp = jax.random.split(case_key)
        x = jax.random.normal(kx, (batch, in_channels, spatial, spatial),
                              dtype=jnp.float32)                      # NCHW
        params = init_params(kp, in_channels, out_channels)
        out = jax.block_until_ready(bottleneck_forward(x, params, stride=stride))
        ref = jax.block_until_ready(ref_forward(x, params, stride=stride))
        assert out.shape == ref.shape, (out.shape, ref.shape)
        err = float(jnp.max(jnp.abs(out - ref)))
        assert jnp.allclose(out, ref, rtol=TOL, atol=TOL), err
        return out.shape

    keys = jax.random.split(key, 3)
    # projection shortcut (cin != expansion*cmid), stride 1: kw-folded 3x3 kernel
    shp = run_case(keys[0], in_channels=4, out_channels=4, stride=1)
    assert shp == (2, 16, 16, 16), shp
    # identity shortcut (cin == expansion*cmid, stride 1)
    run_case(keys[1], in_channels=16, out_channels=4, stride=1)
    # strided block (projection shortcut + strided Pallas 3x3 kernel)
    shp = run_case(keys[2], in_channels=4, out_channels=4, stride=2)
    assert shp == (2, 16, 8, 8), shp

    print("KERNEL_OK")
</pallas_src>

<mosaic_0001>
module attributes {stable_mosaic.version = 11 : i64} {
  func.func @_mm_bias_kernel(%arg0: i32, %arg1: i32, %arg2: i32, %arg3: memref<512x4xbf16, #tpu.memory_space<vmem>>, %arg4: memref<4x4xbf16, #tpu.memory_space<vmem>>, %arg5: memref<1x4xf32, #tpu.memory_space<vmem>>, %arg6: memref<512x4xbf16, #tpu.memory_space<vmem>>, %arg7: memref<512x4xf32, #tpu.memory_space<vmem>>) attributes {dimension_semantics = [#tpu.dimension_semantics<parallel>, #tpu.dimension_semantics<parallel>, #tpu.dimension_semantics<arbitrary>], iteration_bounds = array<i64: 1, 1, 1>, scalar_prefetch = 0 : i64, scratch_operands = 1 : i64, tpu.core_type = #tpu.core_type<tc>, window_params = [{transform_indices = @transform_0, window_bounds = array<i64: 512, 4>}, {transform_indices = @transform_1, window_bounds = array<i64: 4, 4>}, {transform_indices = @transform_2, window_bounds = array<i64: 1, 4>}, {transform_indices = @transform_3, window_bounds = array<i64: 512, 4>}]} {
    %c0_i32 = arith.constant 0 : i32
    %0 = arith.cmpi eq, %arg2, %c0_i32 : i32
    %1 = arith.extui %0 : i1 to i32
    %c0_i32_0 = arith.constant 0 : i32
    %2 = arith.cmpi ne, %1, %c0_i32_0 : i32
    scf.if %2 {
      %cst_10 = arith.constant 0.000000e+00 : f32
      %12 = vector.broadcast %cst_10 : f32 to vector<512x4xf32>
      %c0_11 = arith.constant 0 : index
      %c0_12 = arith.constant 0 : index
      %13 = vector.load %arg7[%c0_11, %c0_12] : memref<512x4xf32, #tpu.memory_space<vmem>>, vector<512x4xf32>
      tpu.vector_store %arg7[%c0_11, %c0_12], %12 {strides = array<i32>} : memref<512x4xf32, #tpu.memory_space<vmem>>, vector<512x4xf32>,
    } else {
    }
    %c0 = arith.constant 0 : index
    %c0_1 = arith.constant 0 : index
    %3 = vector.load %arg7[%c0, %c0_1] : memref<512x4xf32, #tpu.memory_space<vmem>>, vector<512x4xf32>
    %c0_2 = arith.constant 0 : index
    %c0_3 = arith.constant 0 : index
    %4 = vector.load %arg3[%c0_2, %c0_3] : memref<512x4xbf16, #tpu.memory_space<vmem>>, vector<512x4xbf16>
    %c0_4 = arith.constant 0 : index
    %c0_5 = arith.constant 0 : index
    %5 = vector.load %arg4[%c0_4, %c0_5] : memref<4x4xbf16, #tpu.memory_space<vmem>>, vector<4x4xbf16>
    %cst = arith.constant dense<0.000000e+00> : vector<512x4xf32>
    %6 = tpu.matmul %4, %5, %cst {dimension_numbers = #tpu.dot_dimension_numbers<[1], [0], [0], [1], [0, 0, 1, 1], [], []>} : vector<512x4xbf16>, vector<4x4xbf16>, vector<512x4xf32> -> vector<512x4xf32>
    %7 = arith.addf %3, %6 : vector<512x4xf32>
    %c0_6 = arith.constant 0 : index
    %c0_7 = arith.constant 0 : index
    %8 = vector.load %arg7[%c0_6, %c0_7] : memref<512x4xf32, #tpu.memory_space<vmem>>, vector<512x4xf32>
    tpu.vector_store %arg7[%c0_6, %c0_7], %7 {strides = array<i32>} : memref<512x4xf32, #tpu.memory_space<vmem>>, vector<512x4xf32>,
    %c0_i32_8 = arith.constant 0 : i32
    %9 = arith.cmpi eq, %arg2, %c0_i32_8 : i32
    %10 = arith.extui %9 : i1 to i32
    %c0_i32_9 = arith.constant 0 : i32
    %11 = arith.cmpi ne, %10, %c0_i32_9 : i32
    scf.if %11 {
      %c0_10 = arith.constant 0 : index
      %c0_11 = arith.constant 0 : index
      %12 = vector.load %arg7[%c0_10, %c0_11] : memref<512x4xf32, #tpu.memory_space<vmem>>, vector<512x4xf32>
      %c0_12 = arith.constant 0 : index
      %c0_13 = arith.constant 0 : index
      %13 = vector.load %arg5[%c0_12, %c0_13] : memref<1x4xf32, #tpu.memory_space<vmem>>, vector<1x4xf32>
      %14 = vector.broadcast %13 : vector<1x4xf32> to vector<512x4xf32>
      %15 = arith.addf %12, %14 : vector<512x4xf32>
      %cst_14 = arith.constant 0.000000e+00 : f32
      %16 = vector.broadcast %cst_14 : f32 to vector<512x4xf32>
      %17 = arith.maximumf %15, %16 : vector<512x4xf32>
      %18 = arith.truncf %17 : vector<512x4xf32> to vector<512x4xbf16>
      %c0_15 = arith.constant 0 : index
      %c0_16 = arith.constant 0 : index
      %19 = vector.load %arg6[%c0_15, %c0_16] : memref<512x4xbf16, #tpu.memory_space<vmem>>, vector<512x4xbf16>
      tpu.vector_store %arg6[%c0_15, %c0_16], %18 {strides = array<i32>} : memref<512x4xbf16, #tpu.memory_space<vmem>>, vector<512x4xbf16>,
    } else {
    }
    return
  }
  func.func @transform_0(%arg0: i32, %arg1: i32, %arg2: i32) -> (i32, i32) {
    %c0_i32 = arith.constant 0 : i32
    return %arg0, %arg2 : i32, i32
  }
  func.func @transform_1(%arg0: i32, %arg1: i32, %arg2: i32) -> (i32, i32) {
    %c0_i32 = arith.constant 0 : i32
    return %arg2, %arg1 : i32, i32
  }
  func.func @transform_2(%arg0: i32, %arg1: i32, %arg2: i32) -> (i32, i32) {
    %c0_i32 = arith.constant 0 : i32
    %c0_i32_0 = arith.constant 0 : i32
    return %c0_i32, %arg1 : i32, i32
  }
  func.func @transform_3(%arg0: i32, %arg1: i32, %arg2: i32) -> (i32, i32) {
    %c0_i32 = arith.constant 0 : i32
    return %arg0, %arg1 : i32, i32
  }
}

</mosaic_0001>

<llo_original>
// kernel: tpu_custom_call.1
$region0: #{tpu_custom_call.1}
  #allocation0 [shape = 'u32[]', space=smem, size = 0x4, offset = 0x4, fixed_abs, tag = 'smem constant byte address 0x4 - core index']
  #allocation1 [shape = 'u32[144,128]{1,0:T(1,128)}', space=vmem, size = 0x12000, scoped, tag = 'internal scratch']
  #allocation2 [shape = 'f32[512,4]{1,0:T(8,128)}', space=vmem, size = 0x40000, scoped, tag = 'scratch operand']
  %s0 = inlined_call_operand.vmem [shape: bf16[512,4], index: 0, kind: input, shape index: {}]
  %s1 = inlined_call_operand.vmem [shape: bf16[4,4], index: 1, kind: input, shape index: {}]
  %s2 = inlined_call_operand.vmem [shape: f32[1,4], index: 2, kind: input, shape index: {}]
  %s3 = inlined_call_operand.vmem [shape: bf16[512,4], index: 3, kind: output, shape index: {}]
  %s4 = sld [smem:[#allocation0]]
  $region30: #{tpu_custom_call.1} parent=0
    _
  %s6 = ssub.s32 1, %s4
  %s7 = scalar_select 0, %s6, %s4
  // Predicated region
  $region2: #{tpu_custom_call.1} parent=0 // pred_check
    _
  $region3: #{tpu_custom_call.1} parent=0 // pred_check_branch
    %9 = sbr.rel (0) target = $region5
  $region4: #{tpu_custom_call.1} parent=0 // pred_region
    _
  $region5: #{tpu_custom_call.1} parent=0 // pred_fallthru
    _
  // Predicated region
  $region6: #{tpu_custom_call.1} parent=0 // pred_check
    _
  $region7: #{tpu_custom_call.1} parent=0 // pred_check_branch
    %11 = sbr.rel (0) target = $region9
  $region8: #{tpu_custom_call.1} parent=0 // pred_region
    _
  $region9: #{tpu_custom_call.1} parent=0 // pred_fallthru
    _
  // Predicated region
  $region10: #{tpu_custom_call.1} parent=0 // pred_check
    _
  $region11: #{tpu_custom_call.1} parent=0 // pred_check_branch
    %13 = sbr.rel (0) target = $region13
  $region12: #{tpu_custom_call.1} parent=0 // pred_region
    _
  $region13: #{tpu_custom_call.1} parent=0 // pred_fallthru
    _
  %p15 = scmp.eq.s32.totalorder 0, 0
  // Predicated region
  $region14: #{tpu_custom_call.1} parent=0 // pred_check
    %p16 = pneg %p15
  $region15: #{tpu_custom_call.1} parent=0 // pred_check_branch
    %18 = sbr.rel (%p16) target = $region17
  $region16: #{tpu_custom_call.1} parent=0 // pred_region
    %vm19 = vcmask 31744
    %20 = vst.msk [vmem:[#allocation2] sm:$0xff] %vm19, 0.0
    %21 = vst.msk [vmem:[#allocation2 + $0x8] sm:$0xff] %vm19, 0.0
    %22 = vst.msk [vmem:[#allocation2 + $0x10] sm:$0xff] %vm19, 0.0
    %23 = vst.msk [vmem:[#allocation2 + $0x18] sm:$0xff] %vm19, 0.0
    %24 = vst.msk [vmem:[#allocation2 + $0x20] sm:$0xff] %vm19, 0.0
    %25 = vst.msk [vmem:[#allocation2 + $0x28] sm:$0xff] %vm19, 0.0
    %26 = vst.msk [vmem:[#allocation2 + $0x30] sm:$0xff] %vm19, 0.0
    %27 = vst.msk [vmem:[#allocation2 + $0x38] sm:$0xff] %vm19, 0.0
    %28 = vst.msk [vmem:[#allocation2 + $0x40] sm:$0xff] %vm19, 0.0
    %29 = vst.msk [vmem:[#allocation2 + $0x48] sm:$0xff] %vm19, 0.0
    %30 = vst.msk [vmem:[#allocation2 + $0x50] sm:$0xff] %vm19, 0.0
    %31 = vst.msk [vmem:[#allocation2 + $0x58] sm:$0xff] %vm19, 0.0
    %32 = vst.msk [vmem:[#allocation2 + $0x60] sm:$0xff] %vm19, 0.0
    %33 = vst.msk [vmem:[#allocation2 + $0x68] sm:$0xff] %vm19, 0.0
    %34 = vst.msk [vmem:[#allocation2 + $0x70] sm:$0xff] %vm19, 0.0
    %35 = vst.msk [vmem:[#allocation2 + $0x78] sm:$0xff] %vm19, 0.0
    %36 = vst.msk [vmem:[#allocation2 + $0x80] sm:$0xff] %vm19, 0.0
    %37 = vst.msk [vmem:[#allocation2 + $0x88] sm:$0xff] %vm19, 0.0
    %38 = vst.msk [vmem:[#allocation2 + $0x90] sm:$0xff] %vm19, 0.0
    %39 = vst.msk [vmem:[#allocation2 + $0x98] sm:$0xff] %vm19, 0.0
    %40 = vst.msk [vmem:[#allocation2 + $0xa0] sm:$0xff] %vm19, 0.0
    %41 = vst.msk [vmem:[#allocation2 + $0xa8] sm:$0xff] %vm19, 0.0
    %42 = vst.msk [vmem:[#allocation2 + $0xb0] sm:$0xff] %vm19, 0.0
    %43 = vst.msk [vmem:[#allocation2 + $0xb8] sm:$0xff] %vm19, 0.0
    %44 = vst.msk [vmem:[#allocation2 + $0xc0] sm:$0xff] %vm19, 0.0
    %45 = vst.msk [vmem:[#allocation2 + $0xc8] sm:$0xff] %vm19, 0.0
    %46 = vst.msk [vmem:[#allocation2 + $0xd0] sm:$0xff] %vm19, 0.0
    %47 = vst.msk [vmem:[#allocation2 + $0xd8] sm:$0xff] %vm19, 0.0
    %48 = vst.msk [vmem:[#allocation2 + $0xe0] sm:$0xff] %vm19, 0.0
    %49 = vst.msk [vmem:[#allocation2 + $0xe8] sm:$0xff] %vm19, 0.0
    %50 = vst.msk [vmem:[#allocation2 + $0xf0] sm:$0xff] %vm19, 0.0
    %51 = vst.msk [vmem:[#allocation2 + $0xf8] sm:$0xff] %vm19, 0.0
    %52 = vst.msk [vmem:[#allocation2 + $0x100] sm:$0xff] %vm19, 0.0
    %53 = vst.msk [vmem:[#allocation2 + $0x108] sm:$0xff] %vm19, 0.0
    %54 = vst.msk [vmem:[#allocation2 + $0x110] sm:$0xff] %vm19, 0.0
    %55 = vst.msk [vmem:[#allocation2 + $0x118] sm:$0xff] %vm19, 0.0
    %56 = vst.msk [vmem:[#allocation2 + $0x120] sm:$0xff] %vm19, 0.0
    %57 = vst.msk [vmem:[#allocation2 + $0x128] sm:$0xff] %vm19, 0.0
    %58 = vst.msk [vmem:[#allocation2 + $0x130] sm:$0xff] %vm19, 0.0
    %59 = vst.msk [vmem:[#allocation2 + $0x138] sm:$0xff] %vm19, 0.0
    %60 = vst.msk [vmem:[#allocation2 + $0x140] sm:$0xff] %vm19, 0.0
    %61 = vst.msk [vmem:[#allocation2 + $0x148] sm:$0xff] %vm19, 0.0
    %62 = vst.msk [vmem:[#allocation2 + $0x150] sm:$0xff] %vm19, 0.0
    %63 = vst.msk [vmem:[#allocation2 + $0x158] sm:$0xff] %vm19, 0.0
    %64 = vst.msk [vmem:[#allocation2 + $0x160] sm:$0xff] %vm19, 0.0
    %65 = vst.msk [vmem:[#allocation2 + $0x168] sm:$0xff] %vm19, 0.0
    %66 = vst.msk [vmem:[#allocation2 + $0x170] sm:$0xff] %vm19, 0.0
    %67 = vst.msk [vmem:[#allocation2 + $0x178] sm:$0xff] %vm19, 0.0
    %68 = vst.msk [vmem:[#allocation2 + $0x180] sm:$0xff] %vm19, 0.0
    %69 = vst.msk [vmem:[#allocation2 + $0x188] sm:$0xff] %vm19, 0.0
    %70 = vst.msk [vmem:[#allocation2 + $0x190] sm:$0xff] %vm19, 0.0
    %71 = vst.msk [vmem:[#allocation2 + $0x198] sm:$0xff] %vm19, 0.0
    %72 = vst.msk [vmem:[#allocation2 + $0x1a0] sm:$0xff] %vm19, 0.0
    %73 = vst.msk [vmem:[#allocation2 + $0x1a8] sm:$0xff] %vm19, 0.0
    %74 = vst.msk [vmem:[#allocation2 + $0x1b0] sm:$0xff] %vm19, 0.0
    %75 = vst.msk [vmem:[#allocation2 + $0x1b8] sm:$0xff] %vm19, 0.0
    %76 = vst.msk [vmem:[#allocation2 + $0x1c0] sm:$0xff] %vm19, 0.0
    %77 = vst.msk [vmem:[#allocation2 + $0x1c8] sm:$0xff] %vm19, 0.0
    %78 = vst.msk [vmem:[#allocation2 + $0x1d0] sm:$0xff] %vm19, 0.0
    %79 = vst.msk [vmem:[#allocation2 + $0x1d8] sm:$0xff] %vm19, 0.0
    %80 = vst.msk [vmem:[#allocation2 + $0x1e0] sm:$0xff] %vm19, 0.0
    %81 = vst.msk [vmem:[#allocation2 + $0x1e8] sm:$0xff] %vm19, 0.0
    %82 = vst.msk [vmem:[#allocation2 + $0x1f0] sm:$0xff] %vm19, 0.0
    %83 = vst.msk [vmem:[#allocation2 + $0x1f8] sm:$0xff] %vm19, 0.0
  $region17: #{tpu_custom_call.1} parent=0 // pred_fallthru
    _
  %v84 = vld [vmem:[#allocation2] sm:$0xff]
  %v85 = vld [vmem:[#allocation2 + $0x8] sm:$0xff]
  %v86 = vld [vmem:[#allocation2 + $0x10] sm:$0xff]
  %v87 = vld [vmem:[#allocation2 + $0x18] sm:$0xff]
  %v88 = vld [vmem:[#allocation2 + $0x20] sm:$0xff]
  %v89 = vld [vmem:[#allocation2 + $0x28] sm:$0xff]
  %v90 = vld [vmem:[#allocation2 + $0x30] sm:$0xff]
  %v91 = vld [vmem:[#allocation2 + $0x38] sm:$0xff]
  %v92 = vld [vmem:[#allocation2 + $0x40] sm:$0xff]
  %v93 = vld [vmem:[#allocation2 + $0x48] sm:$0xff]
  %v94 = vld [vmem:[#allocation2 + $0x50] sm:$0xff]
  %v95 = vld [vmem:[#allocation2 + $0x58] sm:$0xff]
  %v96 = vld [vmem:[#allocation2 + $0x60] sm:$0xff]
  %v97 = vld [vmem:[#allocation2 + $0x68] sm:$0xff]
  %v98 = vld [vmem:[#allocation2 + $0x70] sm:$0xff]
  %v99 = vld [vmem:[#allocation2 + $0x78] sm:$0xff]
  %v100 = vld [vmem:[#allocation2 + $0x80] sm:$0xff]
  %v101 = vld [vmem:[#allocation2 + $0x88] sm:$0xff]
  %v102 = vld [vmem:[#allocation2 + $0x90] sm:$0xff]
  %v103 = vld [vmem:[#allocation2 + $0x98] sm:$0xff]
  %v104 = vld [vmem:[#allocation2 + $0xa0] sm:$0xff]
  %v105 = vld [vmem:[#allocation2 + $0xa8] sm:$0xff]
  %v106 = vld [vmem:[#allocation2 + $0xb0] sm:$0xff]
  %v107 = vld [vmem:[#allocation2 + $0xb8] sm:$0xff]
  %v108 = vld [vmem:[#allocation2 + $0xc0] sm:$0xff]
  %v109 = vld [vmem:[#allocation2 + $0xc8] sm:$0xff]
  %v110 = vld [vmem:[#allocation2 + $0xd0] sm:$0xff]
  %v111 = vld [vmem:[#allocation2 + $0xd8] sm:$0xff]
  %v112 = vld [vmem:[#allocation2 + $0xe0] sm:$0xff]
  %v113 = vld [vmem:[#allocation2 + $0xe8] sm:$0xff]
  %v114 = vld [vmem:[#allocation2 + $0xf0] sm:$0xff]
  %v115 = vld [vmem:[#allocation2 + $0xf8] sm:$0xff]
  %v116 = vld [vmem:[#allocation2 + $0x100] sm:$0xff]
  %v117 = vld [vmem:[#allocation2 + $0x108] sm:$0xff]
  %v118 = vld [vmem:[#allocation2 + $0x110] sm:$0xff]
  %v119 = vld [vmem:[#allocation2 + $0x118] sm:$0xff]
  %v120 = vld [vmem:[#allocation2 + $0x120] sm:$0xff]
  %v121 = vld [vmem:[#allocation2 + $0x128] sm:$0xff]
  %v122 = vld [vmem:[#allocation2 + $0x130] sm:$0xff]
  %v123 = vld [vmem:[#allocation2 + $0x138] sm:$0xff]
  %v124 = vld [vmem:[#allocation2 + $0x140] sm:$0xff]
  %v125 = vld [vmem:[#allocation2 + $0x148] sm:$0xff]
  %v126 = vld [vmem:[#allocation2 + $0x150] sm:$0xff]
  %v127 = vld [vmem:[#allocation2 + $0x158] sm:$0xff]
  %v128 = vld [vmem:[#allocation2 + $0x160] sm:$0xff]
  %v129 = vld [vmem:[#allocation2 + $0x168] sm:$0xff]
  %v130 = vld [vmem:[#allocation2 + $0x170] sm:$0xff]
  %v131 = vld [vmem:[#allocation2 + $0x178] sm:$0xff]
  %v132 = vld [vmem:[#allocation2 + $0x180] sm:$0xff]
  %v133 = vld [vmem:[#allocation2 + $0x188] sm:$0xff]
  %v134 = vld [vmem:[#allocation2 + $0x190] sm:$0xff]
  %v135 = vld [vmem:[#allocation2 + $0x198] sm:$0xff]
  %v136 = vld [vmem:[#allocation2 + $0x1a0] sm:$0xff]
  %v137 = vld [vmem:[#allocation2 + $0x1a8] sm:$0xff]
  %v138 = vld [vmem:[#allocation2 + $0x1b0] sm:$0xff]
  %v139 = vld [vmem:[#allocation2 + $0x1b8] sm:$0xff]
  %v140 = vld [vmem:[#allocation2 + $0x1c0] sm:$0xff]
  %v141 = vld [vmem:[#allocation2 + $0x1c8] sm:$0xff]
  %v142 = vld [vmem:[#allocation2 + $0x1d0] sm:$0xff]
  %v143 = vld [vmem:[#allocation2 + $0x1d8] sm:$0xff]
  %v144 = vld [vmem:[#allocation2 + $0x1e0] sm:$0xff]
  %v145 = vld [vmem:[#allocation2 + $0x1e8] sm:$0xff]
  %v146 = vld [vmem:[#allocation2 + $0x1f0] sm:$0xff]
  %v147 = vld [vmem:[#allocation2 + $0x1f8] sm:$0xff]
  %v148 = vld [vmem:[%s0] sm:$0xf]
  %v149 = vld [vmem:[%s0 + $0x4] sm:$0xf]
  %v150 = vld [vmem:[%s0 + $0x8] sm:$0xf]
  %v151 = vld [vmem:[%s0 + $0xc] sm:$0xf]
  %v152 = vld [vmem:[%s0 + $0x10] sm:$0xf]
  %v153 = vld [vmem:[%s0 + $0x14] sm:$0xf]
  %v154 = vld [vmem:[%s0 + $0x18] sm:$0xf]
  %v155 = vld [vmem:[%s0 + $0x1c] sm:$0xf]
  %v156 = vld [vmem:[%s0 + $0x20] sm:$0xf]
  %v157 = vld [vmem:[%s0 + $0x24] sm:$0xf]
  %v158 = vld [vmem:[%s0 + $0x28] sm:$0xf]
  %v159 = vld [vmem:[%s0 + $0x2c] sm:$0xf]
  %v160 = vld [vmem:[%s0 + $0x30] sm:$0xf]
  %v161 = vld [vmem:[%s0 + $0x34] sm:$0xf]
  %v162 = vld [vmem:[%s0 + $0x38] sm:$0xf]
  %v163 = vld [vmem:[%s0 + $0x3c] sm:$0xf]
  %v164 = vld [vmem:[%s0 + $0x40] sm:$0xf]
  %v165 = vld [vmem:[%s0 + $0x44] sm:$0xf]
  %v166 = vld [vmem:[%s0 + $0x48] sm:$0xf]
  %v167 = vld [vmem:[%s0 + $0x4c] sm:$0xf]
  %v168 = vld [vmem:[%s0 + $0x50] sm:$0xf]
  %v169 = vld [vmem:[%s0 + $0x54] sm:$0xf]
  %v170 = vld [vmem:[%s0 + $0x58] sm:$0xf]
  %v171 = vld [vmem:[%s0 + $0x5c] sm:$0xf]
  %v172 = vld [vmem:[%s0 + $0x60] sm:$0xf]
  %v173 = vld [vmem:[%s0 + $0x64] sm:$0xf]
  %v174 = vld [vmem:[%s0 + $0x68] sm:$0xf]
  %v175 = vld [vmem:[%s0 + $0x6c] sm:$0xf]
  %v176 = vld [vmem:[%s0 + $0x70] sm:$0xf]
  %v177 = vld [vmem:[%s0 + $0x74] sm:$0xf]
  %v178 = vld [vmem:[%s0 + $0x78] sm:$0xf]
  %v179 = vld [vmem:[%s0 + $0x7c] sm:$0xf]
  %v180 = vld [vmem:[%s0 + $0x80] sm:$0xf]
  %v181 = vld [vmem:[%s0 + $0x84] sm:$0xf]
  %v182 = vld [vmem:[%s0 + $0x88] sm:$0xf]
  %v183 = vld [vmem:[%s0 + $0x8c] sm:$0xf]
  %v184 = vld [vmem:[%s0 + $0x90] sm:$0xf]
  %v185 = vld [vmem:[%s0 + $0x94] sm:$0xf]
  %v186 = vld [vmem:[%s0 + $0x98] sm:$0xf]
  %v187 = vld [vmem:[%s0 + $0x9c] sm:$0xf]
  %v188 = vld [vmem:[%s0 + $0xa0] sm:$0xf]
  %v189 = vld [vmem:[%s0 + $0xa4] sm:$0xf]
  %v190 = vld [vmem:[%s0 + $0xa8] sm:$0xf]
  %v191 = vld [vmem:[%s0 + $0xac] sm:$0xf]
  %v192 = vld [vmem:[%s0 + $0xb0] sm:$0xf]
  %v193 = vld [vmem:[%s0 + $0xb4] sm:$0xf]
  %v194 = vld [vmem:[%s0 + $0xb8] sm:$0xf]
  %v195 = vld [vmem:[%s0 + $0xbc] sm:$0xf]
  %v196 = vld [vmem:[%s0 + $0xc0] sm:$0xf]
  %v197 = vld [vmem:[%s0 + $0xc4] sm:$0xf]
  %v198 = vld [vmem:[%s0 + $0xc8] sm:$0xf]
  %v199 = vld [vmem:[%s0 + $0xcc] sm:$0xf]
  %v200 = vld [vmem:[%s0 + $0xd0] sm:$0xf]
  %v201 = vld [vmem:[%s0 + $0xd4] sm:$0xf]
  %v202 = vld [vmem:[%s0 + $0xd8] sm:$0xf]
  %v203 = vld [vmem:[%s0 + $0xdc] sm:$0xf]
  %v204 = vld [vmem:[%s0 + $0xe0] sm:$0xf]
  %v205 = vld [vmem:[%s0 + $0xe4] sm:$0xf]
  %v206 = vld [vmem:[%s0 + $0xe8] sm:$0xf]
  %v207 = vld [vmem:[%s0 + $0xec] sm:$0xf]
  %v208 = vld [vmem:[%s0 + $0xf0] sm:$0xf]
  %v209 = vld [vmem:[%s0 + $0xf4] sm:$0xf]
  %v210 = vld [vmem:[%s0 + $0xf8] sm:$0xf]
  %v211 = vld [vmem:[%s0 + $0xfc] sm:$0xf]
  %v212 = vld [vmem:[%s1] sm:$0x3]
  %v277 = vunpack.c.l.b16 %v148
  %v278 = vunpack.c.l.b16 %v149
  %v279 = vunpack.c.l.b16 %v150
  %v280 = vunpack.c.l.b16 %v151
  %v281 = vunpack.c.l.b16 %v152
  %v282 = vunpack.c.l.b16 %v153
  %v283 = vunpack.c.l.b16 %v154
  %v284 = vunpack.c.l.b16 %v155
  %v285 = vunpack.c.l.b16 %v156
  %v286 = vunpack.c.l.b16 %v157
  %v287 = vunpack.c.l.b16 %v158
  %v288 = vunpack.c.l.b16 %v159
  %v289 = vunpack.c.l.b16 %v160
  %v290 = vunpack.c.l.b16 %v161
  %v291 = vunpack.c.l.b16 %v162
  %v292 = vunpack.c.l.b16 %v163
  %v293 = vunpack.c.l.b16 %v164
  %v294 = vunpack.c.l.b16 %v165
  %v295 = vunpack.c.l.b16 %v166
  %v296 = vunpack.c.l.b16 %v167
  %v297 = vunpack.c.l.b16 %v168
  %v298 = vunpack.c.l.b16 %v169
  %v299 = vunpack.c.l.b16 %v170
  %v300 = vunpack.c.l.b16 %v171
  %v301 = vunpack.c.l.b16 %v172
  %v302 = vunpack.c.l.b16 %v173
  %v303 = vunpack.c.l.b16 %v174
  %v304 = vunpack.c.l.b16 %v175
  %v305 = vunpack.c.l.b16 %v176
  %v306 = vunpack.c.l.b16 %v177
  %v307 = vunpack.c.l.b16 %v178
  %v308 = vunpack.c.l.b16 %v179
  %v309 = vunpack.c.l.b16 %v180
  %v310 = vunpack.c.l.b16 %v181
  %v311 = vunpack.c.l.b16 %v182
  %v312 = vunpack.c.l.b16 %v183
  %v313 = vunpack.c.l.b16 %v184
  %v314 = vunpack.c.l.b16 %v185
  %v315 = vunpack.c.l.b16 %v186
  %v316 = vunpack.c.l.b16 %v187
  %v317 = vunpack.c.l.b16 %v188
  %v318 = vunpack.c.l.b16 %v189
  %v319 = vunpack.c.l.b16 %v190
  %v320 = vunpack.c.l.b16 %v191
  %v321 = vunpack.c.l.b16 %v192
  %v322 = vunpack.c.l.b16 %v193
  %v323 = vunpack.c.l.b16 %v194
  %v324 = vunpack.c.l.b16 %v195
  %v325 = vunpack.c.l.b16 %v196
  %v326 = vunpack.c.l.b16 %v197
  %v327 = vunpack.c.l.b16 %v198
  %v328 = vunpack.c.l.b16 %v199
  %v329 = vunpack.c.l.b16 %v200
  %v330 = vunpack.c.l.b16 %v201
  %v331 = vunpack.c.l.b16 %v202
  %v332 = vunpack.c.l.b16 %v203
  %v333 = vunpack.c.l.b16 %v204
  %v334 = vunpack.c.l.b16 %v205
  %v335 = vunpack.c.l.b16 %v206
  %v336 = vunpack.c.l.b16 %v207
  %v337 = vunpack.c.l.b16 %v208
  %v338 = vunpack.c.l.b16 %v209
  %v339 = vunpack.c.l.b16 %v210
  %v340 = vunpack.c.l.b16 %v211
  %v341 = vpack.c.b16 %v278, %v277
  %v342 = vpack.c.b16 %v280, %v279
  %v343 = vpack.c.b16 %v282, %v281
  %v344 = vpack.c.b16 %v284, %v283
  %v345 = vpack.c.b16 %v286, %v285
  %v346 = vpack.c.b16 %v288, %v287
  %v347 = vpack.c.b16 %v290, %v289
  %v348 = vpack.c.b16 %v292, %v291
  %v349 = vpack.c.b16 %v294, %v293
  %v350 = vpack.c.b16 %v296, %v295
  %v351 = vpack.c.b16 %v298, %v297
  %v352 = vpack.c.b16 %v300, %v299
  %v353 = vpack.c.b16 %v302, %v301
  %v354 = vpack.c.b16 %v304, %v303
  %v355 = vpack.c.b16 %v306, %v305
  %v356 = vpack.c.b16 %v308, %v307
  %v357 = vpack.c.b16 %v310, %v309
  %v358 = vpack.c.b16 %v312, %v311
  %v359 = vpack.c.b16 %v314, %v313
  %v360 = vpack.c.b16 %v316, %v315
  %v361 = vpack.c.b16 %v318, %v317
  %v362 = vpack.c.b16 %v320, %v319
  %v363 = vpack.c.b16 %v322, %v321
  %v364 = vpack.c.b16 %v324, %v323
  %v365 = vpack.c.b16 %v326, %v325
  %v366 = vpack.c.b16 %v328, %v327
  %v367 = vpack.c.b16 %v330, %v329
  %v368 = vpack.c.b16 %v332, %v331
  %v369 = vpack.c.b16 %v334, %v333
  %v370 = vpack.c.b16 %v336, %v335
  %v371 = vpack.c.b16 %v338, %v337
  %v372 = vpack.c.b16 %v340, %v339
  %vm373 = vcmask 31744
  %v375 = vsel %vm373, %v341, 0
  %v378 = vsel %vm373, %v342, 0
  %v381 = vsel %vm373, %v343, 0
  %v384 = vsel %vm373, %v344, 0
  %v387 = vsel %vm373, %v345, 0
  %v390 = vsel %vm373, %v346, 0
  %v393 = vsel %vm373, %v347, 0
  %v396 = vsel %vm373, %v348, 0
  %v399 = vsel %vm373, %v349, 0
  %v402 = vsel %vm373, %v350, 0
  %v405 = vsel %vm373, %v351, 0
  %v408 = vsel %vm373, %v352, 0
  %v411 = vsel %vm373, %v353, 0
  %v414 = vsel %vm373, %v354, 0
  %v417 = vsel %vm373, %v355, 0
  %v420 = vsel %vm373, %v356, 0
  %v423 = vsel %vm373, %v357, 0
  %v426 = vsel %vm373, %v358, 0
  %v429 = vsel %vm373, %v359, 0
  %v432 = vsel %vm373, %v360, 0
  %v435 = vsel %vm373, %v361, 0
  %v438 = vsel %vm373, %v362, 0
  %v441 = vsel %vm373, %v363, 0
  %v444 = vsel %vm373, %v364, 0
  %v447 = vsel %vm373, %v365, 0
  %v450 = vsel %vm373, %v366, 0
  %v453 = vsel %vm373, %v367, 0
  %v456 = vsel %vm373, %v368, 0
  %v459 = vsel %vm373, %v369, 0
  %v462 = vsel %vm373, %v370, 0
  %v465 = vsel %vm373, %v371, 0
  %v468 = vsel %vm373, %v372, 0
  %vm470 = vcmask 1041408
  %v472 = vsel %vm470, %v212, 0
  %474 = vmatprep.subr.bf16.mxu0 0
  %475 = vmatpush1.bf16.msra.mxu0 %v472
  %476 = vmatprep.subr.bf16.mxu0 0
  %477 = vmatpush1.bf16.msra.mxu0 0
  %478 = vmatprep.subr.bf16.mxu0 0
  %479 = vmatpush1.bf16.msra.mxu0 0
  %480 = vmatprep.subr.bf16.mxu0 0
  %481 = vmatpush1.bf16.msra.mxu0 0
  %482 = vmatprep.subr.bf16.mxu0 0
  %483 = vmatpush1.bf16.msra.mxu0 0
  %484 = vmatprep.subr.bf16.mxu0 0
  %485 = vmatpush1.bf16.msra.mxu0 0
  %486 = vmatprep.subr.bf16.mxu0 0
  %487 = vmatpush1.bf16.msra.mxu0 0
  %488 = vmatprep.subr.bf16.mxu0 0
  %489 = vmatpush1.bf16.msra.mxu0 0
  %490 = vmatprep.subr.bf16.mxu0 0
  %491 = vmatpush1.bf16.msra.mxu0 0
  %492 = vmatprep.subr.bf16.mxu0 0
  %493 = vmatpush1.bf16.msra.mxu0 0
  %494 = vmatprep.subr.bf16.mxu0 0
  %495 = vmatpush1.bf16.msra.mxu0 0
  %496 = vmatprep.subr.bf16.mxu0 0
  %497 = vmatpush1.bf16.msra.mxu0 0
  %498 = vmatprep.subr.bf16.mxu0 0
  %499 = vmatpush1.bf16.msra.mxu0 0
  %500 = vmatprep.subr.bf16.mxu0 0
  %501 = vmatpush1.bf16.msra.mxu0 0
  %502 = vmatprep.subr.bf16.mxu0 0
  %503 = vmatpush1.bf16.msra.mxu0 0
  %504 = vmatprep.subr.bf16.mxu0 0
  %505 = vmatpush1.bf16.msra.mxu0 0
  %506 = vmatprep.mubr.bf16.mxu0 0
  %507 = vmatmul.mubr.bf16.gmra.mrb[0].mxu0 %v375
  %v508 = vpop.f32.mrb[0].mxu0
  %v509 = vadd.f32 0.0, %v508
  %v510 = vpop.f32.mrb[0].mxu0
  %v511 = vpop.f32.mrb[0].mxu0
  %v512 = vadd.f32 0.0, %v511
  %v513 = vpop.f32.mrb[0].mxu0
  %514 = vmatprep.mubr.bf16.mxu0 0
  %515 = vmatmul.mubr.bf16.gmra.mrb[0].mxu0 %v378
  %v516 = vpop.f32.mrb[0].mxu0
  %v517 = vadd.f32 0.0, %v516
  %v518 = vpop.f32.mrb[0].mxu0
  %v519 = vpop.f32.mrb[0].mxu0
  %v520 = vadd.f32 0.0, %v519
  %v521 = vpop.f32.mrb[0].mxu0
  %522 = vmatprep.mubr.bf16.mxu0 0
  %523 = vmatmul.mubr.bf16.gmra.mrb[0].mxu0 %v381
  %v524 = vpop.f32.mrb[0].mxu0
  %v525 = vadd.f32 0.0, %v524
  %v526 = vpop.f32.mrb[0].mxu0
  %v527 = vpop.f32.mrb[0].mxu0
  %v528 = vadd.f32 0.0, %v527
  %v529 = vpop.f32.mrb[0].mxu0
  %530 = vmatprep.mubr.bf16.mxu0 0
  %531 = vmatmul.mubr.bf16.gmra.mrb[0].mxu0 %v384
  %v532 = vpop.f32.mrb[0].mxu0
  %v533 = vadd.f32 0.0, %v532
  %v534 = vpop.f32.mrb[0].mxu0
  %v535 = vpop.f32.mrb[0].mxu0
  %v536 = vadd.f32 0.0, %v535
  %v537 = vpop.f32.mrb[0].mxu0
  %538 = vmatprep.mubr.bf16.mxu0 0
  %539 = vmatmul.mubr.bf16.gmra.mrb[0].mxu0 %v387
  %v540 = vpop.f32.mrb[0].mxu0
  %v541 = vadd.f32 0.0, %v540
  %v542 = vpop.f32.mrb[0].mxu0
  %v543 = vpop.f32.mrb[0].mxu0
  %v544 = vadd.f32 0.0, %v543
  %v545 = vpop.f32.mrb[0].mxu0
  %546 = vmatprep.mubr.bf16.mxu0 0
  %547 = vmatmul.mubr.bf16.gmra.mrb[0].mxu0 %v390
  %v548 = vpop.f32.mrb[0].mxu0
  %v549 = vadd.f32 0.0, %v548
  %v550 = vpop.f32.mrb[0].mxu0
  %v551 = vpop.f32.mrb[0].mxu0
  %v552 = vadd.f32 0.0, %v551
  %v553 = vpop.f32.mrb[0].mxu0
  %554 = vmatprep.mubr.bf16.mxu0 0
  %555 = vmatmul.mubr.bf16.gmra.mrb[0].mxu0 %v393
  %v556 = vpop.f32.mrb[0].mxu0
  %v557 = vadd.f32 0.0, %v556
  %v558 = vpop.f32.mrb[0].mxu0
  %v559 = vpop.f32.mrb[0].mxu0
  %v560 = vadd.f32 0.0, %v559
  %v561 = vpop.f32.mrb[0].mxu0
  %562 = vmatprep.mubr.bf16.mxu0 0
  %563 = vmatmul.mubr.bf16.gmra.mrb[0].mxu0 %v396
  %v564 = vpop.f32.mrb[0].mxu0
  %v565 = vadd.f32 0.0, %v564
  %v566 = vpop.f32.mrb[0].mxu0
  %v567 = vpop.f32.mrb[0].mxu0
  %v568 = vadd.f32 0.0, %v567
  %v569 = vpop.f32.mrb[0].mxu0
  %570 = vmatprep.mubr.bf16.mxu0 0
  %571 = vmatmul.mubr.bf16.gmra.mrb[0].mxu0 %v399
  %v572 = vpop.f32.mrb[0].mxu0
  %v573 = vadd.f32 0.0, %v572
  %v574 = vpop.f32.mrb[0].mxu0
  %v575 = vpop.f32.mrb[0].mxu0
  %v576 = vadd.f32 0.0, %v575
  %v577 = vpop.f32.mrb[0].mxu0
  %578 = vmatprep.mubr.bf16.mxu0 0
  %579 = vmatmul.mubr.bf16.gmra.mrb[0].mxu0 %v402
  %v580 = vpop.f32.mrb[0].mxu0
  %v581 = vadd.f32 0.0, %v580
  %v582 = vpop.f32.mrb[0].mxu0
  %v583 = vpop.f32.mrb[0].mxu0
  %v584 = vadd.f32 0.0, %v583
  %v585 = vpop.f32.mrb[0].mxu0
  %586 = vmatprep.mubr.bf16.mxu0 0
  %587 = vmatmul.mubr.bf16.gmra.mrb[0].mxu0 %v405
  %v588 = vpop.f32.mrb[0].mxu0
  %v589 = vadd.f32 0.0, %v588
  %v590 = vpop.f32.mrb[0].mxu0
  %v591 = vpop.f32.mrb[0].mxu0
  %v592 = vadd.f32 0.0, %v591
  %v593 = vpop.f32.mrb[0].mxu0
  %594 = vmatprep.mubr.bf16.mxu0 0
  %595 = vmatmul.mubr.bf16.gmra.mrb[0].mxu0 %v408
  %v596 = vpop.f32.mrb[0].mxu0
  %v597 = vadd.f32 0.0, %v596
  %v598 = vpop.f32.mrb[0].mxu0
  %v599 = vpop.f32.mrb[0].mxu0
  %v600 = vadd.f32 0.0, %v599
  %v601 = vpop.f32.mrb[0].mxu0
  %602 = vmatprep.mubr.bf16.mxu0 0
  %603 = vmatmul.mubr.bf16.gmra.mrb[0].mxu0 %v411
  %v604 = vpop.f32.mrb[0].mxu0
  %v605 = vadd.f32 0.0, %v604
  %v606 = vpop.f32.mrb[0].mxu0
  %v607 = vpop.f32.mrb[0].mxu0
  %v608 = vadd.f32 0.0, %v607
  %v609 = vpop.f32.mrb[0].mxu0
  %610 = vmatprep.mubr.bf16.mxu0 0
  %611 = vmatmul.mubr.bf16.gmra.mrb[0].mxu0 %v414
  %v612 = vpop.f32.mrb[0].mxu0
  %v613 = vadd.f32 0.0, %v612
  %v614 = vpop.f32.mrb[0].mxu0
  %v615 = vpop.f32.mrb[0].mxu0
  %v616 = vadd.f32 0.0, %v615
  %v617 = vpop.f32.mrb[0].mxu0
  %618 = vmatprep.mubr.bf16.mxu0 0
  %619 = vmatmul.mubr.bf16.gmra.mrb[0].mxu0 %v417
  %v620 = vpop.f32.mrb[0].mxu0
  %v621 = vadd.f32 0.0, %v620
  %v622 = vpop.f32.mrb[0].mxu0
  %v623 = vpop.f32.mrb[0].mxu0
  %v624 = vadd.f32 0.0, %v623
  %v625 = vpop.f32.mrb[0].mxu0
  %626 = vmatprep.mubr.bf16.mxu0 0
  %627 = vmatmul.mubr.bf16.gmra.mrb[0].mxu0 %v420
  %v628 = vpop.f32.mrb[0].mxu0
  %v629 = vadd.f32 0.0, %v628
  %v630 = vpop.f32.mrb[0].mxu0
  %v631 = vpop.f32.mrb[0].mxu0
  %v632 = vadd.f32 0.0, %v631
  %v633 = vpop.f32.mrb[0].mxu0
  %634 = vmatprep.mubr.bf16.mxu0 0
  %635 = vmatmul.mubr.bf16.gmra.mrb[0].mxu0 %v423
  %v636 = vpop.f32.mrb[0].mxu0
  %v637 = vadd.f32 0.0, %v636
  %v638 = vpop.f32.mrb[0].mxu0
  %v639 = vpop.f32.mrb[0].mxu0
  %v640 = vadd.f32 0.0, %v639
  %v641 = vpop.f32.mrb[0].mxu0
  %642 = vmatprep.mubr.bf16.mxu0 0
  %643 = vmatmul.mubr.bf16.gmra.mrb[0].mxu0 %v426
  %v644 = vpop.f32.mrb[0].mxu0
  %v645 = vadd.f32 0.0, %v644
  %v646 = vpop.f32.mrb[0].mxu0
  %v647 = vpop.f32.mrb[0].mxu0
  %v648 = vadd.f32 0.0, %v647
  %v649 = vpop.f32.mrb[0].mxu0
  %650 = vmatprep.mubr.bf16.mxu0 0
  %651 = vmatmul.mubr.bf16.gmra.mrb[0].mxu0 %v429
  %v652 = vpop.f32.mrb[0].mxu0
  %v653 = vadd.f32 0.0, %v652
  %v654 = vpop.f32.mrb[0].mxu0
  %v655 = vpop.f32.mrb[0].mxu0
  %v656 = vadd.f32 0.0, %v655
  %v657 = vpop.f32.mrb[0].mxu0
  %658 = vmatprep.mubr.bf16.mxu0 0
  %659 = vmatmul.mubr.bf16.gmra.mrb[0].mxu0 %v432
  %v660 = vpop.f32.mrb[0].mxu0
  %v661 = vadd.f32 0.0, %v660
  %v662 = vpop.f32.mrb[0].mxu0
  %v663 = vpop.f32.mrb[0].mxu0
  %v664 = vadd.f32 0.0, %v663
  %v665 = vpop.f32.mrb[0].mxu0
  %666 = vmatprep.mubr.bf16.mxu0 0
  %667 = vmatmul.mubr.bf16.gmra.mrb[0].mxu0 %v435
  %v668 = vpop.f32.mrb[0].mxu0
  %v669 = vadd.f32 0.0, %v668
  %v670 = vpop.f32.mrb[0].mxu0
  %v671 = vpop.f32.mrb[0].mxu0
  %v672 = vadd.f32 0.0, %v671
  %v673 = vpop.f32.mrb[0].mxu0
  %674 = vmatprep.mubr.bf16.mxu0 0
  %675 = vmatmul.mubr.bf16.gmra.mrb[0].mxu0 %v438
  %v676 = vpop.f32.mrb[0].mxu0
  %v677 = vadd.f32 0.0, %v676
  %v678 = vpop.f32.mrb[0].mxu0
  %v679 = vpop.f32.mrb[0].mxu0
  %v680 = vadd.f32 0.0, %v679
  %v681 = vpop.f32.mrb[0].mxu0
  %682 = vmatprep.mubr.bf16.mxu0 0
  %683 = vmatmul.mubr.bf16.gmra.mrb[0].mxu0 %v441
  %v684 = vpop.f32.mrb[0].mxu0
  %v685 = vadd.f32 0.0, %v684
  %v686 = vpop.f32.mrb[0].mxu0
  %v687 = vpop.f32.mrb[0].mxu0
  %v688 = vadd.f32 0.0, %v687
  %v689 = vpop.f32.mrb[0].mxu0
  %690 = vmatprep.mubr.bf16.mxu0 0
  %691 = vmatmul.mubr.bf16.gmra.mrb[0].mxu0 %v444
  %v692 = vpop.f32.mrb[0].mxu0
  %v693 = vadd.f32 0.0, %v692
  %v694 = vpop.f32.mrb[0].mxu0
  %v695 = vpop.f32.mrb[0].mxu0
  %v696 = vadd.f32 0.0, %v695
  %v697 = vpop.f32.mrb[0].mxu0
  %698 = vmatprep.mubr.bf16.mxu0 0
  %699 = vmatmul.mubr.bf16.gmra.mrb[0].mxu0 %v447
  %v700 = vpop.f32.mrb[0].mxu0
  %v701 = vadd.f32 0.0, %v700
  %v702 = vpop.f32.mrb[0].mxu0
  %v703 = vpop.f32.mrb[0].mxu0
  %v704 = vadd.f32 0.0, %v703
  %v705 = vpop.f32.mrb[0].mxu0
  %706 = vmatprep.mubr.bf16.mxu0 0
  %707 = vmatmul.mubr.bf16.gmra.mrb[0].mxu0 %v450
  %v708 = vpop.f32.mrb[0].mxu0
  %v709 = vadd.f32 0.0, %v708
  %v710 = vpop.f32.mrb[0].mxu0
  %v711 = vpop.f32.mrb[0].mxu0
  %v712 = vadd.f32 0.0, %v711
  %v713 = vpop.f32.mrb[0].mxu0
  %714 = vmatprep.mubr.bf16.mxu0 0
  %715 = vmatmul.mubr.bf16.gmra.mrb[0].mxu0 %v453
  %v716 = vpop.f32.mrb[0].mxu0
  %v717 = vadd.f32 0.0, %v716
  %v718 = vpop.f32.mrb[0].mxu0
  %v719 = vpop.f32.mrb[0].mxu0
  %v720 = vadd.f32 0.0, %v719
  %v721 = vpop.f32.mrb[0].mxu0
  %722 = vmatprep.mubr.bf16.mxu0 0
  %723 = vmatmul.mubr.bf16.gmra.mrb[0].mxu0 %v456
  %v724 = vpop.f32.mrb[0].mxu0
  %v725 = vadd.f32 0.0, %v724
  %v726 = vpop.f32.mrb[0].mxu0
  %v727 = vpop.f32.mrb[0].mxu0
  %v728 = vadd.f32 0.0, %v727
  %v729 = vpop.f32.mrb[0].mxu0
  %730 = vmatprep.mubr.bf16.mxu0 0
  %731 = vmatmul.mubr.bf16.gmra.mrb[0].mxu0 %v459
  %v732 = vpop.f32.mrb[0].mxu0
  %v733 = vadd.f32 0.0, %v732
  %v734 = vpop.f32.mrb[0].mxu0
  %v735 = vpop.f32.mrb[0].mxu0
  %v736 = vadd.f32 0.0, %v735
  %v737 = vpop.f32.mrb[0].mxu0
  %738 = vmatprep.mubr.bf16.mxu0 0
  %739 = vmatmul.mubr.bf16.gmra.mrb[0].mxu0 %v462
  %v740 = vpop.f32.mrb[0].mxu0
  %v741 = vadd.f32 0.0, %v740
  %v742 = vpop.f32.mrb[0].mxu0
  %v743 = vpop.f32.mrb[0].mxu0
  %v744 = vadd.f32 0.0, %v743
  %v745 = vpop.f32.mrb[0].mxu0
  %746 = vmatprep.mubr.bf16.mxu0 0
  %747 = vmatmul.mubr.bf16.gmra.mrb[0].mxu0 %v465
  %v748 = vpop.f32.mrb[0].mxu0
  %v749 = vadd.f32 0.0, %v748
  %v750 = vpop.f32.mrb[0].mxu0
  %v751 = vpop.f32.mrb[0].mxu0
  %v752 = vadd.f32 0.0, %v751
  %v753 = vpop.f32.mrb[0].mxu0
  %754 = vmatprep.mubr.bf16.mxu0 0
  %755 = vmatmul.mubr.bf16.gmra.mrb[0].mxu0 %v468
  %v756 = vpop.f32.mrb[0].mxu0
  %v757 = vadd.f32 0.0, %v756
  %v758 = vpop.f32.mrb[0].mxu0
  %v759 = vpop.f32.mrb[0].mxu0
  %v760 = vadd.f32 0.0, %v759
  %v761 = vpop.f32.mrb[0].mxu0
  %762 = vdwg.mxu0
  %v763 = vadd.f32 %v84, %v509
  %v764 = vadd.f32 %v85, %v512
  %v765 = vadd.f32 %v86, %v517
  %v766 = vadd.f32 %v87, %v520
  %v767 = vadd.f32 %v88, %v525
  %v768 = vadd.f32 %v89, %v528
  %v769 = vadd.f32 %v90, %v533
  %v770 = vadd.f32 %v91, %v536
  %v771 = vadd.f32 %v92, %v541
  %v772 = vadd.f32 %v93, %v544
  %v773 = vadd.f32 %v94, %v549
  %v774 = vadd.f32 %v95, %v552
  %v775 = vadd.f32 %v96, %v557
  %v776 = vadd.f32 %v97, %v560
  %v777 = vadd.f32 %v98, %v565
  %v778 = vadd.f32 %v99, %v568
  %v779 = vadd.f32 %v100, %v573
  %v780 = vadd.f32 %v101, %v576
  %v781 = vadd.f32 %v102, %v581
  %v782 = vadd.f32 %v103, %v584
  %v783 = vadd.f32 %v104, %v589
  %v784 = vadd.f32 %v105, %v592
  %v785 = vadd.f32 %v106, %v597
  %v786 = vadd.f32 %v107, %v600
  %v787 = vadd.f32 %v108, %v605
  %v788 = vadd.f32 %v109, %v608
  %v789 = vadd.f32 %v110, %v613
  %v790 = vadd.f32 %v111, %v616
  %v791 = vadd.f32 %v112, %v621
  %v792 = vadd.f32 %v113, %v624
  %v793 = vadd.f32 %v114, %v629
  %v794 = vadd.f32 %v115, %v632
  %v795 = vadd.f32 %v116, %v637
  %v796 = vadd.f32 %v117, %v640
  %v797 = vadd.f32 %v118, %v645
  %v798 = vadd.f32 %v119, %v648
  %v799 = vadd.f32 %v120, %v653
  %v800 = vadd.f32 %v121, %v656
  %v801 = vadd.f32 %v122, %v661
  %v802 = vadd.f32 %v123, %v664
  %v803 = vadd.f32 %v124, %v669
  %v804 = vadd.f32 %v125, %v672
  %v805 = vadd.f32 %v126, %v677
  %v806 = vadd.f32 %v127, %v680
  %v807 = vadd.f32 %v128, %v685
  %v808 = vadd.f32 %v129, %v688
  %v809 = vadd.f32 %v130, %v693
  %v810 = vadd.f32 %v131, %v696
  %v811 = vadd.f32 %v132, %v701
  %v812 = vadd.f32 %v133, %v704
  %v813 = vadd.f32 %v134, %v709
  %v814 = vadd.f32 %v135, %v712
  %v815 = vadd.f32 %v136, %v717
  %v816 = vadd.f32 %v137, %v720
  %v817 = vadd.f32 %v138, %v725
  %v818 = vadd.f32 %v139, %v728
  %v819 = vadd.f32 %v140, %v733
  %v820 = vadd.f32 %v141, %v736
  %v821 = vadd.f32 %v142, %v741
  %v822 = vadd.f32 %v143, %v744
  %v823 = vadd.f32 %v144, %v749
  %v824 = vadd.f32 %v145, %v752
  %v825 = vadd.f32 %v146, %v757
  %v826 = vadd.f32 %v147, %v760
  %827 = vst.msk [vmem:[#allocation2] sm:$0xff] %vm373, %v763
  %828 = vst.msk [vmem:[#allocation2 + $0x8] sm:$0xff] %vm373, %v764
  %829 = vst.msk [vmem:[#allocation2 + $0x10] sm:$0xff] %vm373, %v765
  %830 = vst.msk [vmem:[#allocation2 + $0x18] sm:$0xff] %vm373, %v766
  %831 = vst.msk [vmem:[#allocation2 + $0x20] sm:$0xff] %vm373, %v767
  %832 = vst.msk [vmem:[#allocation2 + $0x28] sm:$0xff] %vm373, %v768
  %833 = vst.msk [vmem:[#allocation2 + $0x30] sm:$0xff] %vm373, %v769
  %834 = vst.msk [vmem:[#allocation2 + $0x38] sm:$0xff] %vm373, %v770
  %835 = vst.msk [vmem:[#allocation2 + $0x40] sm:$0xff] %vm373, %v771
  %836 = vst.msk [vmem:[#allocation2 + $0x48] sm:$0xff] %vm373, %v772
  %837 = vst.msk [vmem:[#allocation2 + $0x50] sm:$0xff] %vm373, %v773
  %838 = vst.msk [vmem:[#allocation2 + $0x58] sm:$0xff] %vm373, %v774
  %839 = vst.msk [vmem:[#allocation2 + $0x60] sm:$0xff] %vm373, %v775
  %840 = vst.msk [vmem:[#allocation2 + $0x68] sm:$0xff] %vm373, %v776
  %841 = vst.msk [vmem:[#allocation2 + $0x70] sm:$0xff] %vm373, %v777
  %842 = vst.msk [vmem:[#allocation2 + $0x78] sm:$0xff] %vm373, %v778
  %843 = vst.msk [vmem:[#allocation2 + $0x80] sm:$0xff] %vm373, %v779
  %844 = vst.msk [vmem:[#allocation2 + $0x88] sm:$0xff] %vm373, %v780
  %845 = vst.msk [vmem:[#allocation2 + $0x90] sm:$0xff] %vm373, %v781
  %846 = vst.msk [vmem:[#allocation2 + $0x98] sm:$0xff] %vm373, %v782
  %847 = vst.msk [vmem:[#allocation2 + $0xa0] sm:$0xff] %vm373, %v783
  %848 = vst.msk [vmem:[#allocation2 + $0xa8] sm:$0xff] %vm373, %v784
  %849 = vst.msk [vmem:[#allocation2 + $0xb0] sm:$0xff] %vm373, %v785
  %850 = vst.msk [vmem:[#allocation2 + $0xb8] sm:$0xff] %vm373, %v786
  %851 = vst.msk [vmem:[#allocation2 + $0xc0] sm:$0xff] %vm373, %v787
  %852 = vst.msk [vmem:[#allocation2 + $0xc8] sm:$0xff] %vm373, %v788
  %853 = vst.msk [vmem:[#allocation2 + $0xd0] sm:$0xff] %vm373, %v789
  %854 = vst.msk [vmem:[#allocation2 + $0xd8] sm:$0xff] %vm373, %v790
  %855 = vst.msk [vmem:[#allocation2 + $0xe0] sm:$0xff] %vm373, %v791
  %856 = vst.msk [vmem:[#allocation2 + $0xe8] sm:$0xff] %vm373, %v792
  %857 = vst.msk [vmem:[#allocation2 + $0xf0] sm:$0xff] %vm373, %v793
  %858 = vst.msk [vmem:[#allocation2 + $0xf8] sm:$0xff] %vm373, %v794
  %859 = vst.msk [vmem:[#allocation2 + $0x100] sm:$0xff] %vm373, %v795
  %860 = vst.msk [vmem:[#allocation2 + $0x108] sm:$0xff] %vm373, %v796
  %861 = vst.msk [vmem:[#allocation2 + $0x110] sm:$0xff] %vm373, %v797
  %862 = vst.msk [vmem:[#allocation2 + $0x118] sm:$0xff] %vm373, %v798
  %863 = vst.msk [vmem:[#allocation2 + $0x120] sm:$0xff] %vm373, %v799
  %864 = vst.msk [vmem:[#allocation2 + $0x128] sm:$0xff] %vm373, %v800
  %865 = vst.msk [vmem:[#allocation2 + $0x130] sm:$0xff] %vm373, %v801
  %866 = vst.msk [vmem:[#allocation2 + $0x138] sm:$0xff] %vm373, %v802
  %867 = vst.msk [vmem:[#allocation2 + $0x140] sm:$0xff] %vm373, %v803
  %868 = vst.msk [vmem:[#allocation2 + $0x148] sm:$0xff] %vm373, %v804
  %869 = vst.msk [vmem:[#allocation2 + $0x150] sm:$0xff] %vm373, %v805
  %870 = vst.msk [vmem:[#allocation2 + $0x158] sm:$0xff] %vm373, %v806
  %871 = vst.msk [vmem:[#allocation2 + $0x160] sm:$0xff] %vm373, %v807
  %872 = vst.msk [vmem:[#allocation2 + $0x168] sm:$0xff] %vm373, %v808
  %873 = vst.msk [vmem:[#allocation2 + $0x170] sm:$0xff] %vm373, %v809
  %874 = vst.msk [vmem:[#allocation2 + $0x178] sm:$0xff] %vm373, %v810
  %875 = vst.msk [vmem:[#allocation2 + $0x180] sm:$0xff] %vm373, %v811
  %876 = vst.msk [vmem:[#allocation2 + $0x188] sm:$0xff] %vm373, %v812
  %877 = vst.msk [vmem:[#allocation2 + $0x190] sm:$0xff] %vm373, %v813
  %878 = vst.msk [vmem:[#allocation2 + $0x198] sm:$0xff] %vm373, %v814
  %879 = vst.msk [vmem:[#allocation2 + $0x1a0] sm:$0xff] %vm373, %v815
  %880 = vst.msk [vmem:[#allocation2 + $0x1a8] sm:$0xff] %vm373, %v816
  %881 = vst.msk [vmem:[#allocation2 + $0x1b0] sm:$0xff] %vm373, %v817
  %882 = vst.msk [vmem:[#allocation2 + $0x1b8] sm:$0xff] %vm373, %v818
  %883 = vst.msk [vmem:[#allocation2 + $0x1c0] sm:$0xff] %vm373, %v819
  %884 = vst.msk [vmem:[#allocation2 + $0x1c8] sm:$0xff] %vm373, %v820
  %885 = vst.msk [vmem:[#allocation2 + $0x1d0] sm:$0xff] %vm373, %v821
  %886 = vst.msk [vmem:[#allocation2 + $0x1d8] sm:$0xff] %vm373, %v822
  %887 = vst.msk [vmem:[#allocation2 + $0x1e0] sm:$0xff] %vm373, %v823
  %888 = vst.msk [vmem:[#allocation2 + $0x1e8] sm:$0xff] %vm373, %v824
  %889 = vst.msk [vmem:[#allocation2 + $0x1f0] sm:$0xff] %vm373, %v825
  %890 = vst.msk [vmem:[#allocation2 + $0x1f8] sm:$0xff] %vm373, %v826
  // Predicated region
  $region18: #{tpu_custom_call.1} parent=0 // pred_check
    %p891 = pneg %p15
  $region19: #{tpu_custom_call.1} parent=0 // pred_check_branch
    %893 = sbr.rel (%p891) target = $region21
  $region20: #{tpu_custom_call.1} parent=0 // pred_region
    %v894 = vld [vmem:[#allocation2] sm:$0xff]
    %v895 = vld [vmem:[#allocation2 + $0x8] sm:$0xff]
    %v896 = vld [vmem:[#allocation2 + $0x10] sm:$0xff]
    %v897 = vld [vmem:[#allocation2 + $0x18] sm:$0xff]
    %v898 = vld [vmem:[#allocation2 + $0x20] sm:$0xff]
    %v899 = vld [vmem:[#allocation2 + $0x28] sm:$0xff]
    %v900 = vld [vmem:[#allocation2 + $0x30] sm:$0xff]
    %v901 = vld [vmem:[#allocation2 + $0x38] sm:$0xff]
    %v902 = vld [vmem:[#allocation2 + $0x40] sm:$0xff]
    %v903 = vld [vmem:[#allocation2 + $0x48] sm:$0xff]
    %v904 = vld [vmem:[#allocation2 + $0x50] sm:$0xff]
    %v905 = vld [vmem:[#allocation2 + $0x58] sm:$0xff]
    %v906 = vld [vmem:[#allocation2 + $0x60] sm:$0xff]
    %v907 = vld [vmem:[#allocation2 + $0x68] sm:$0xff]
    %v908 = vld [vmem:[#allocation2 + $0x70] sm:$0xff]
    %v909 = vld [vmem:[#allocation2 + $0x78] sm:$0xff]
    %v910 = vld [vmem:[#allocation2 + $0x80] sm:$0xff]
    %v911 = vld [vmem:[#allocation2 + $0x88] sm:$0xff]
    %v912 = vld [vmem:[#allocation2 + $0x90] sm:$0xff]
    %v913 = vld [vmem:[#allocation2 + $0x98] sm:$0xff]
    %v914 = vld [vmem:[#allocation2 + $0xa0] sm:$0xff]
    %v915 = vld [vmem:[#allocation2 + $0xa8] sm:$0xff]
    %v916 = vld [vmem:[#allocation2 + $0xb0] sm:$0xff]
    %v917 = vld [vmem:[#allocation2 + $0xb8] sm:$0xff]
    %v918 = vld [vmem:[#allocation2 + $0xc0] sm:$0xff]
    %v919 = vld [vmem:[#allocation2 + $0xc8] sm:$0xff]
    %v920 = vld [vmem:[#allocation2 + $0xd0] sm:$0xff]
    %v921 = vld [vmem:[#allocation2 + $0xd8] sm:$0xff]
    %v922 = vld [vmem:[#allocation2 + $0xe0] sm:$0xff]
    %v923 = vld [vmem:[#allocation2 + $0xe8] sm:$0xff]
    %v924 = vld [vmem:[#allocation2 + $0xf0] sm:$0xff]
    %v925 = vld [vmem:[#allocation2 + $0xf8] sm:$0xff]
    %v926 = vld [vmem:[#allocation2 + $0x100] sm:$0xff]
    %v927 = vld [vmem:[#allocation2 + $0x108] sm:$0xff]
    %v928 = vld [vmem:[#allocation2 + $0x110] sm:$0xff]
    %v929 = vld [vmem:[#allocation2 + $0x118] sm:$0xff]
    %v930 = vld [vmem:[#allocation2 + $0x120] sm:$0xff]
    %v931 = vld [vmem:[#allocation2 + $0x128] sm:$0xff]
    %v932 = vld [vmem:[#allocation2 + $0x130] sm:$0xff]
    %v933 = vld [vmem:[#allocation2 + $0x138] sm:$0xff]
    %v934 = vld [vmem:[#allocation2 + $0x140] sm:$0xff]
    %v935 = vld [vmem:[#allocation2 + $0x148] sm:$0xff]
    %v936 = vld [vmem:[#allocation2 + $0x150] sm:$0xff]
    %v937 = vld [vmem:[#allocation2 + $0x158] sm:$0xff]
    %v938 = vld [vmem:[#allocation2 + $0x160] sm:$0xff]
    %v939 = vld [vmem:[#allocation2 + $0x168] sm:$0xff]
    %v940 = vld [vmem:[#allocation2 + $0x170] sm:$0xff]
    %v941 = vld [vmem:[#allocation2 + $0x178] sm:$0xff]
    %v942 = vld [vmem:[#allocation2 + $0x180] sm:$0xff]
    %v943 = vld [vmem:[#allocation2 + $0x188] sm:$0xff]
    %v944 = vld [vmem:[#allocation2 + $0x190] sm:$0xff]
    %v945 = vld [vmem:[#allocation2 + $0x198] sm:$0xff]
    %v946 = vld [vmem:[#allocation2 + $0x1a0] sm:$0xff]
    %v947 = vld [vmem:[#allocation2 + $0x1a8] sm:$0xff]
    %v948 = vld [vmem:[#allocation2 + $0x1b0] sm:$0xff]
    %v949 = vld [vmem:[#allocation2 + $0x1b8] sm:$0xff]
    %v950 = vld [vmem:[#allocation2 + $0x1c0] sm:$0xff]
    %v951 = vld [vmem:[#allocation2 + $0x1c8] sm:$0xff]
    %v952 = vld [vmem:[#allocation2 + $0x1d0] sm:$0xff]
    %v953 = vld [vmem:[#allocation2 + $0x1d8] sm:$0xff]
    %v954 = vld [vmem:[#allocation2 + $0x1e0] sm:$0xff]
    %v955 = vld [vmem:[#allocation2 + $0x1e8] sm:$0xff]
    %v956 = vld [vmem:[#allocation2 + $0x1f0] sm:$0xff]
    %v957 = vld [vmem:[#allocation2 + $0x1f8] sm:$0xff]
    %v958 = vld [vmem:[%s2] sm:$0x1]
    %v960 = vlaneseq
    %v961 = vshrl.u32 %v960, 7
    %v962 = vsub.s32 0, %v961
    %v963 = vrot.slane %v958, %v962
    %v965 = vadd.f32 %v894, %v963
    %v966 = vadd.f32 %v895, %v963
    %v967 = vadd.f32 %v896, %v963
    %v968 = vadd.f32 %v897, %v963
    %v969 = vadd.f32 %v898, %v963
    %v970 = vadd.f32 %v899, %v963
    %v971 = vadd.f32 %v900, %v963
    %v972 = vadd.f32 %v901, %v963
    %v973 = vadd.f32 %v902, %v963
    %v974 = vadd.f32 %v903, %v963
    %v975 = vadd.f32 %v904, %v963
    %v976 = vadd.f32 %v905, %v963
    %v977 = vadd.f32 %v906, %v963
    %v978 = vadd.f32 %v907, %v963
    %v979 = vadd.f32 %v908, %v963
    %v980 = vadd.f32 %v909, %v963
    %v981 = vadd.f32 %v910, %v963
    %v982 = vadd.f32 %v911, %v963
    %v983 = vadd.f32 %v912, %v963
    %v984 = vadd.f32 %v913, %v963
    %v985 = vadd.f32 %v914, %v963
    %v986 = vadd.f32 %v915, %v963
    %v987 = vadd.f32 %v916, %v963
    %v988 = vadd.f32 %v917, %v963
    %v989 = vadd.f32 %v918, %v963
    %v990 = vadd.f32 %v919, %v963
    %v991 = vadd.f32 %v920, %v963
    %v992 = vadd.f32 %v921, %v963
    %v993 = vadd.f32 %v922, %v963
    %v994 = vadd.f32 %v923, %v963
    %v995 = vadd.f32 %v924, %v963
    %v996 = vadd.f32 %v925, %v963
    %v997 = vadd.f32 %v926, %v963
    %v998 = vadd.f32 %v927, %v963
    %v999 = vadd.f32 %v928, %v963
    %v1000 = vadd.f32 %v929, %v963
    %v1001 = vadd.f32 %v930, %v963
    %v1002 = vadd.f32 %v931, %v963
    %v1003 = vadd.f32 %v932, %v963
    %v1004 = vadd.f32 %v933, %v963
    %v1005 = vadd.f32 %v934, %v963
    %v1006 = vadd.f32 %v935, %v963
    %v1007 = vadd.f32 %v936, %v963
    %v1008 = vadd.f32 %v937, %v963
    %v1009 = vadd.f32 %v938, %v963
    %v1010 = vadd.f32 %v939, %v963
    %v1011 = vadd.f32 %v940, %v963
    %v1012 = vadd.f32 %v941, %v963
    %v1013 = vadd.f32 %v942, %v963
    %v1014 = vadd.f32 %v943, %v963
    %v1015 = vadd.f32 %v944, %v963
    %v1016 = vadd.f32 %v945, %v963
    %v1017 = vadd.f32 %v946, %v963
    %v1018 = vadd.f32 %v947, %v963
    %v1019 = vadd.f32 %v948, %v963
    %v1020 = vadd.f32 %v949, %v963
    %v1021 = vadd.f32 %v950, %v963
    %v1022 = vadd.f32 %v951, %v963
    %v1023 = vadd.f32 %v952, %v963
    %v1024 = vadd.f32 %v953, %v963
    %v1025 = vadd.f32 %v954, %v963
    %v1026 = vadd.f32 %v955, %v963
    %v1027 = vadd.f32 %v956, %v963
    %v1028 = vadd.f32 %v957, %v963
    %v1029 = vmax.f32 %v965, 0.0
    %v1030 = vmax.f32 %v966, 0.0
    %v1031 = vmax.f32 %v967, 0.0
    %v1032 = vmax.f32 %v968, 0.0
    %v1033 = vmax.f32 %v969, 0.0
    %v1034 = vmax.f32 %v970, 0.0
    %v1035 = vmax.f32 %v971, 0.0
    %v1036 = vmax.f32 %v972, 0.0
    %v1037 = vmax.f32 %v973, 0.0
    %v1038 = vmax.f32 %v974, 0.0
    %v1039 = vmax.f32 %v975, 0.0
    %v1040 = vmax.f32 %v976, 0.0
    %v1041 = vmax.f32 %v977, 0.0
    %v1042 = vmax.f32 %v978, 0.0
    %v1043 = vmax.f32 %v979, 0.0
    %v1044 = vmax.f32 %v980, 0.0
    %v1045 = vmax.f32 %v981, 0.0
    %v1046 = vmax.f32 %v982, 0.0
    %v1047 = vmax.f32 %v983, 0.0
    %v1048 = vmax.f32 %v984, 0.0
    %v1049 = vmax.f32 %v985, 0.0
    %v1050 = vmax.f32 %v986, 0.0
    %v1051 = vmax.f32 %v987, 0.0
    %v1052 = vmax.f32 %v988, 0.0
    %v1053 = vmax.f32 %v989, 0.0
    %v1054 = vmax.f32 %v990, 0.0
    %v1055 = vmax.f32 %v991, 0.0
    %v1056 = vmax.f32 %v992, 0.0
    %v1057 = vmax.f32 %v993, 0.0
    %v1058 = vmax.f32 %v994, 0.0
    %v1059 = vmax.f32 %v995, 0.0
    %v1060 = vmax.f32 %v996, 0.0
    %v1061 = vmax.f32 %v997, 0.0
    %v1062 = vmax.f32 %v998, 0.0
    %v1063 = vmax.f32 %v999, 0.0
    %v1064 = vmax.f32 %v1000, 0.0
    %v1065 = vmax.f32 %v1001, 0.0
    %v1066 = vmax.f32 %v1002, 0.0
    %v1067 = vmax.f32 %v1003, 0.0
    %v1068 = vmax.f32 %v1004, 0.0
    %v1069 = vmax.f32 %v1005, 0.0
    %v1070 = vmax.f32 %v1006, 0.0
    %v1071 = vmax.f32 %v1007, 0.0
    %v1072 = vmax.f32 %v1008, 0.0
    %v1073 = vmax.f32 %v1009, 0.0
    %v1074 = vmax.f32 %v1010, 0.0
    %v1075 = vmax.f32 %v1011, 0.0
    %v1076 = vmax.f32 %v1012, 0.0
    %v1077 = vmax.f32 %v1013, 0.0
    %v1078 = vmax.f32 %v1014, 0.0
    %v1079 = vmax.f32 %v1015, 0.0
    %v1080 = vmax.f32 %v1016, 0.0
    %v1081 = vmax.f32 %v1017, 0.0
    %v1082 = vmax.f32 %v1018, 0.0
    %v1083 = vmax.f32 %v1019, 0.0
    %v1084 = vmax.f32 %v1020, 0.0
    %v1085 = vmax.f32 %v1021, 0.0
    %v1086 = vmax.f32 %v1022, 0.0
    %v1087 = vmax.f32 %v1023, 0.0
    %v1088 = vmax.f32 %v1024, 0.0
    %v1089 = vmax.f32 %v1025, 0.0
    %v1090 = vmax.f32 %v1026, 0.0
    %v1091 = vmax.f32 %v1027, 0.0
    %v1092 = vmax.f32 %v1028, 0.0
    %v1093 = vpack.c.bf16 %v1030, %v1029
    %v1094 = vpack.c.bf16 %v1032, %v1031
    %v1095 = vpack.c.bf16 %v1034, %v1033
    %v1096 = vpack.c.bf16 %v1036, %v1035
    %v1097 = vpack.c.bf16 %v1038, %v1037
    %v1098 = vpack.c.bf16 %v1040, %v1039
    %v1099 = vpack.c.bf16 %v1042, %v1041
    %v1100 = vpack.c.bf16 %v1044, %v1043
    %v1101 = vpack.c.bf16 %v1046, %v1045
    %v1102 = vpack.c.bf16 %v1048, %v1047
    %v1103 = vpack.c.bf16 %v1050, %v1049
    %v1104 = vpack.c.bf16 %v1052, %v1051
    %v1105 = vpack.c.bf16 %v1054, %v1053
    %v1106 = vpack.c.bf16 %v1056, %v1055
    %v1107 = vpack.c.bf16 %v1058, %v1057
    %v1108 = vpack.c.bf16 %v1060, %v1059
    %v1109 = vpack.c.bf16 %v1062, %v1061
    %v1110 = vpack.c.bf16 %v1064, %v1063
    %v1111 = vpack.c.bf16 %v1066, %v1065
    %v1112 = vpack.c.bf16 %v1068, %v1067
    %v1113 = vpack.c.bf16 %v1070, %v1069
    %v1114 = vpack.c.bf16 %v1072, %v1071
    %v1115 = vpack.c.bf16 %v1074, %v1073
    %v1116 = vpack.c.bf16 %v1076, %v1075
    %v1117 = vpack.c.bf16 %v1078, %v1077
    %v1118 = vpack.c.bf16 %v1080, %v1079
    %v1119 = vpack.c.bf16 %v1082, %v1081
    %v1120 = vpack.c.bf16 %v1084, %v1083
    %v1121 = vpack.c.bf16 %v1086, %v1085
    %v1122 = vpack.c.bf16 %v1088, %v1087
    %v1123 = vpack.c.bf16 %v1090, %v1089
    %v1124 = vpack.c.bf16 %v1092, %v1091
    %v1157 = vunpack.c.l.b16 %v1093
    %v1158 = vunpack.c.h.b16 %v1093
    %v1159 = vunpack.c.l.b16 %v1094
    %v1160 = vunpack.c.h.b16 %v1094
    %v1161 = vunpack.c.l.b16 %v1095
    %v1162 = vunpack.c.h.b16 %v1095
    %v1163 = vunpack.c.l.b16 %v1096
    %v1164 = vunpack.c.h.b16 %v1096
    %v1165 = vunpack.c.l.b16 %v1097
    %v1166 = vunpack.c.h.b16 %v1097
    %v1167 = vunpack.c.l.b16 %v1098
    %v1168 = vunpack.c.h.b16 %v1098
    %v1169 = vunpack.c.l.b16 %v1099
    %v1170 = vunpack.c.h.b16 %v1099
    %v1171 = vunpack.c.l.b16 %v1100
    %v1172 = vunpack.c.h.b16 %v1100
    %v1173 = vunpack.c.l.b16 %v1101
    %v1174 = vunpack.c.h.b16 %v1101
    %v1175 = vunpack.c.l.b16 %v1102
    %v1176 = vunpack.c.h.b16 %v1102
    %v1177 = vunpack.c.l.b16 %v1103
    %v1178 = vunpack.c.h.b16 %v1103
    %v1179 = vunpack.c.l.b16 %v1104
    %v1180 = vunpack.c.h.b16 %v1104
    %v1181 = vunpack.c.l.b16 %v1105
    %v1182 = vunpack.c.h.b16 %v1105
    %v1183 = vunpack.c.l.b16 %v1106
    %v1184 = vunpack.c.h.b16 %v1106
    %v1185 = vunpack.c.l.b16 %v1107
    %v1186 = vunpack.c.h.b16 %v1107
    %v1187 = vunpack.c.l.b16 %v1108
    %v1188 = vunpack.c.h.b16 %v1108
    %v1189 = vunpack.c.l.b16 %v1109
    %v1190 = vunpack.c.h.b16 %v1109
    %v1191 = vunpack.c.l.b16 %v1110
    %v1192 = vunpack.c.h.b16 %v1110
    %v1193 = vunpack.c.l.b16 %v1111
    %v1194 = vunpack.c.h.b16 %v1111
    %v1195 = vunpack.c.l.b16 %v1112
    %v1196 = vunpack.c.h.b16 %v1112
    %v1197 = vunpack.c.l.b16 %v1113
    %v1198 = vunpack.c.h.b16 %v1113
    %v1199 = vunpack.c.l.b16 %v1114
    %v1200 = vunpack.c.h.b16 %v1114
    %v1201 = vunpack.c.l.b16 %v1115
    %v1202 = vunpack.c.h.b16 %v1115
    %v1203 = vunpack.c.l.b16 %v1116
    %v1204 = vunpack.c.h.b16 %v1116
    %v1205 = vunpack.c.l.b16 %v1117
    %v1206 = vunpack.c.h.b16 %v1117
    %v1207 = vunpack.c.l.b16 %v1118
    %v1208 = vunpack.c.h.b16 %v1118
    %v1209 = vunpack.c.l.b16 %v1119
    %v1210 = vunpack.c.h.b16 %v1119
    %v1211 = vunpack.c.l.b16 %v1120
    %v1212 = vunpack.c.h.b16 %v1120
    %v1213 = vunpack.c.l.b16 %v1121
    %v1214 = vunpack.c.h.b16 %v1121
    %v1215 = vunpack.c.l.b16 %v1122
    %v1216 = vunpack.c.h.b16 %v1122
    %v1217 = vunpack.c.l.b16 %v1123
    %v1218 = vunpack.c.h.b16 %v1123
    %v1219 = vunpack.c.l.b16 %v1124
    %v1220 = vunpack.c.h.b16 %v1124
    %v1221 = vpack.c.b16 %v1157, %v1157
    %v1222 = vpack.c.b16 %v1158, %v1158
    %v1223 = vpack.c.b16 %v1159, %v1159
    %v1224 = vpack.c.b16 %v1160, %v1160
    %v1225 = vpack.c.b16 %v1161, %v1161
    %v1226 = vpack.c.b16 %v1162, %v1162
    %v1227 = vpack.c.b16 %v1163, %v1163
    %v1228 = vpack.c.b16 %v1164, %v1164
    %v1229 = vpack.c.b16 %v1165, %v1165
    %v1230 = vpack.c.b16 %v1166, %v1166
    %v1231 = vpack.c.b16 %v1167, %v1167
    %v1232 = vpack.c.b16 %v1168, %v1168
    %v1233 = vpack.c.b16 %v1169, %v1169
    %v1234 = vpack.c.b16 %v1170, %v1170
    %v1235 = vpack.c.b16 %v1171, %v1171
    %v1236 = vpack.c.b16 %v1172, %v1172
    %v1237 = vpack.c.b16 %v1173, %v1173
    %v1238 = vpack.c.b16 %v1174, %v1174
    %v1239 = vpack.c.b16 %v1175, %v1175
    %v1240 = vpack.c.b16 %v1176, %v1176
    %v1241 = vpack.c.b16 %v1177, %v1177
    %v1242 = vpack.c.b16 %v1178, %v1178
    %v1243 = vpack.c.b16 %v1179, %v1179
    %v1244 = vpack.c.b16 %v1180, %v1180
    %v1245 = vpack.c.b16 %v1181, %v1181
    %v1246 = vpack.c.b16 %v1182, %v1182
    %v1247 = vpack.c.b16 %v1183, %v1183
    %v1248 = vpack.c.b16 %v1184, %v1184
    %v1249 = vpack.c.b16 %v1185, %v1185
    %v1250 = vpack.c.b16 %v1186, %v1186
    %v1251 = vpack.c.b16 %v1187, %v1187
    %v1252 = vpack.c.b16 %v1188, %v1188
    %v1253 = vpack.c.b16 %v1189, %v1189
    %v1254 = vpack.c.b16 %v1190, %v1190
    %v1255 = vpack.c.b16 %v1191, %v1191
    %v1256 = vpack.c.b16 %v1192, %v1192
    %v1257 = vpack.c.b16 %v1193, %v1193
    %v1258 = vpack.c.b16 %v1194, %v1194
    %v1259 = vpack.c.b16 %v1195, %v1195
    %v1260 = vpack.c.b16 %v1196, %v1196
    %v1261 = vpack.c.b16 %v1197, %v1197
    %v1262 = vpack.c.b16 %v1198, %v1198
    %v1263 = vpack.c.b16 %v1199, %v1199
    %v1264 = vpack.c.b16 %v1200, %v1200
    %v1265 = vpack.c.b16 %v1201, %v1201
    %v1266 = vpack.c.b16 %v1202, %v1202
    %v1267 = vpack.c.b16 %v1203, %v1203
    %v1268 = vpack.c.b16 %v1204, %v1204
    %v1269 = vpack.c.b16 %v1205, %v1205
    %v1270 = vpack.c.b16 %v1206, %v1206
    %v1271 = vpack.c.b16 %v1207, %v1207
    %v1272 = vpack.c.b16 %v1208, %v1208
    %v1273 = vpack.c.b16 %v1209, %v1209
    %v1274 = vpack.c.b16 %v1210, %v1210
    %v1275 = vpack.c.b16 %v1211, %v1211
    %v1276 = vpack.c.b16 %v1212, %v1212
    %v1277 = vpack.c.b16 %v1213, %v1213
    %v1278 = vpack.c.b16 %v1214, %v1214
    %v1279 = vpack.c.b16 %v1215, %v1215
    %v1280 = vpack.c.b16 %v1216, %v1216
    %v1281 = vpack.c.b16 %v1217, %v1217
    %v1282 = vpack.c.b16 %v1218, %v1218
    %v1283 = vpack.c.b16 %v1219, %v1219
    %v1284 = vpack.c.b16 %v1220, %v1220
    %vm1349 = vcmask 27648
    %1350 = vst.msk [vmem:[%s3] sm:$0xf] %vm1349, %v1221
    %1351 = vst.msk [vmem:[%s3 + $0x4] sm:$0xf] %vm1349, %v1222
    %1352 = vst.msk [vmem:[%s3 + $0x8] sm:$0xf] %vm1349, %v1223
    %1353 = vst.msk [vmem:[%s3 + $0xc] sm:$0xf] %vm1349, %v1224
    %1354 = vst.msk [vmem:[%s3 + $0x10] sm:$0xf] %vm1349, %v1225
    %1355 = vst.msk [vmem:[%s3 + $0x14] sm:$0xf] %vm1349, %v1226
    %1356 = vst.msk [vmem:[%s3 + $0x18] sm:$0xf] %vm1349, %v1227
    %1357 = vst.msk [vmem:[%s3 + $0x1c] sm:$0xf] %vm1349, %v1228
    %1358 = vst.msk [vmem:[%s3 + $0x20] sm:$0xf] %vm1349, %v1229
    %1359 = vst.msk [vmem:[%s3 + $0x24] sm:$0xf] %vm1349, %v1230
    %1360 = vst.msk [vmem:[%s3 + $0x28] sm:$0xf] %vm1349, %v1231
    %1361 = vst.msk [vmem:[%s3 + $0x2c] sm:$0xf] %vm1349, %v1232
    %1362 = vst.msk [vmem:[%s3 + $0x30] sm:$0xf] %vm1349, %v1233
    %1363 = vst.msk [vmem:[%s3 + $0x34] sm:$0xf] %vm1349, %v1234
    %1364 = vst.msk [vmem:[%s3 + $0x38] sm:$0xf] %vm1349, %v1235
    %1365 = vst.msk [vmem:[%s3 + $0x3c] sm:$0xf] %vm1349, %v1236
    %1366 = vst.msk [vmem:[%s3 + $0x40] sm:$0xf] %vm1349, %v1237
    %1367 = vst.msk [vmem:[%s3 + $0x44] sm:$0xf] %vm1349, %v1238
    %1368 = vst.msk [vmem:[%s3 + $0x48] sm:$0xf] %vm1349, %v1239
    %1369 = vst.msk [vmem:[%s3 + $0x4c] sm:$0xf] %vm1349, %v1240
    %1370 = vst.msk [vmem:[%s3 + $0x50] sm:$0xf] %vm1349, %v1241
    %1371 = vst.msk [vmem:[%s3 + $0x54] sm:$0xf] %vm1349, %v1242
    %1372 = vst.msk [vmem:[%s3 + $0x58] sm:$0xf] %vm1349, %v1243
    %1373 = vst.msk [vmem:[%s3 + $0x5c] sm:$0xf] %vm1349, %v1244
    %1374 = vst.msk [vmem:[%s3 + $0x60] sm:$0xf] %vm1349, %v1245
    %1375 = vst.msk [vmem:[%s3 + $0x64] sm:$0xf] %vm1349, %v1246
    %1376 = vst.msk [vmem:[%s3 + $0x68] sm:$0xf] %vm1349, %v1247
    %1377 = vst.msk [vmem:[%s3 + $0x6c] sm:$0xf] %vm1349, %v1248
    %1378 = vst.msk [vmem:[%s3 + $0x70] sm:$0xf] %vm1349, %v1249
    %1379 = vst.msk [vmem:[%s3 + $0x74] sm:$0xf] %vm1349, %v1250
    %1380 = vst.msk [vmem:[%s3 + $0x78] sm:$0xf] %vm1349, %v1251
    %1381 = vst.msk [vmem:[%s3 + $0x7c] sm:$0xf] %vm1349, %v1252
    %1382 = vst.msk [vmem:[%s3 + $0x80] sm:$0xf] %vm1349, %v1253
    %1383 = vst.msk [vmem:[%s3 + $0x84] sm:$0xf] %vm1349, %v1254
    %1384 = vst.msk [vmem:[%s3 + $0x88] sm:$0xf] %vm1349, %v1255
    %1385 = vst.msk [vmem:[%s3 + $0x8c] sm:$0xf] %vm1349, %v1256
    %1386 = vst.msk [vmem:[%s3 + $0x90] sm:$0xf] %vm1349, %v1257
    %1387 = vst.msk [vmem:[%s3 + $0x94] sm:$0xf] %vm1349, %v1258
    %1388 = vst.msk [vmem:[%s3 + $0x98] sm:$0xf] %vm1349, %v1259
    %1389 = vst.msk [vmem:[%s3 + $0x9c] sm:$0xf] %vm1349, %v1260
    %1390 = vst.msk [vmem:[%s3 + $0xa0] sm:$0xf] %vm1349, %v1261
    %1391 = vst.msk [vmem:[%s3 + $0xa4] sm:$0xf] %vm1349, %v1262
    %1392 = vst.msk [vmem:[%s3 + $0xa8] sm:$0xf] %vm1349, %v1263
    %1393 = vst.msk [vmem:[%s3 + $0xac] sm:$0xf] %vm1349, %v1264
    %1394 = vst.msk [vmem:[%s3 + $0xb0] sm:$0xf] %vm1349, %v1265
    %1395 = vst.msk [vmem:[%s3 + $0xb4] sm:$0xf] %vm1349, %v1266
    %1396 = vst.msk [vmem:[%s3 + $0xb8] sm:$0xf] %vm1349, %v1267
    %1397 = vst.msk [vmem:[%s3 + $0xbc] sm:$0xf] %vm1349, %v1268
    %1398 = vst.msk [vmem:[%s3 + $0xc0] sm:$0xf] %vm1349, %v1269
    %1399 = vst.msk [vmem:[%s3 + $0xc4] sm:$0xf] %vm1349, %v1270
    %1400 = vst.msk [vmem:[%s3 + $0xc8] sm:$0xf] %vm1349, %v1271
    %1401 = vst.msk [vmem:[%s3 + $0xcc] sm:$0xf] %vm1349, %v1272
    %1402 = vst.msk [vmem:[%s3 + $0xd0] sm:$0xf] %vm1349, %v1273
    %1403 = vst.msk [vmem:[%s3 + $0xd4] sm:$0xf] %vm1349, %v1274
    %1404 = vst.msk [vmem:[%s3 + $0xd8] sm:$0xf] %vm1349, %v1275
    %1405 = vst.msk [vmem:[%s3 + $0xdc] sm:$0xf] %vm1349, %v1276
    %1406 = vst.msk [vmem:[%s3 + $0xe0] sm:$0xf] %vm1349, %v1277
    %1407 = vst.msk [vmem:[%s3 + $0xe4] sm:$0xf] %vm1349, %v1278
    %1408 = vst.msk [vmem:[%s3 + $0xe8] sm:$0xf] %vm1349, %v1279
    %1409 = vst.msk [vmem:[%s3 + $0xec] sm:$0xf] %vm1349, %v1280
    %1410 = vst.msk [vmem:[%s3 + $0xf0] sm:$0xf] %vm1349, %v1281
    %1411 = vst.msk [vmem:[%s3 + $0xf4] sm:$0xf] %vm1349, %v1282
    %1412 = vst.msk [vmem:[%s3 + $0xf8] sm:$0xf] %vm1349, %v1283
    %1413 = vst.msk [vmem:[%s3 + $0xfc] sm:$0xf] %vm1349, %v1284
  $region21: #{tpu_custom_call.1} parent=0 // pred_fallthru
    _
  // Predicated region
  $region22: #{tpu_custom_call.1} parent=0 // pred_check
    _
  $region23: #{tpu_custom_call.1} parent=0 // pred_check_branch
    %1415 = sbr.rel (0) target = $region25
  $region24: #{tpu_custom_call.1} parent=0 // pred_region
    _
  $region25: #{tpu_custom_call.1} parent=0 // pred_fallthru
    _
  // Predicated region
  $region26: #{tpu_custom_call.1} parent=0 // pred_check
    _
  $region27: #{tpu_custom_call.1} parent=0 // pred_check_branch
    %1417 = sbr.rel (0) target = $region29
  $region28: #{tpu_custom_call.1} parent=0 // pred_region
    _
  $region29: #{tpu_custom_call.1} parent=0 // pred_fallthru
    _

</llo_original>
